<compile_context>
chip_gen: v7x
topology: tpu7x:2x2x1
jax: 0.10.0
libtpu: 0.0.40
codegen_flags: <defaults>
</compile_context>

<pallas_src>
import jax
import jax.numpy as jnp
from jax import lax
from jax.experimental import pallas as pl
from jax.experimental.pallas import tpu as pltpu  # noqa: F401  (TPU backend)

# ----------------------------- problem sizes ------------------------------
B = 2            # batch
S = 8            # sequence length
IN_SIZE = 16     # input_size
H = 32           # hidden_size
C = 4            # num_classes
L = 3            # num_layers
EPS = 1e-5       # nn.LayerNorm default eps
INV_SQRT2 = 0.7071067811865476
BS = B * S
LOG2_S = 3       # S == 8 (power of two, used for the block-diagonal mask)

assert 4 * H == 128 and (L + 1) * H == 128 and (1 << LOG2_S) == S, \
    "packing layout assumes H=32, L=3, S=8"

# ---- packed weight-slab row offsets (all multiples of 8 -> sublane aligned) ----
W1_OFF = 0                      # L blocks of [H, 4H]   (rows   0..96)
W2T_OFF = L * H                 # L blocks of [H, 4H]   (rows  96..192)  (w2 pre-transposed)
WEMB_OFF = 2 * L * H            # [IN_SIZE, 128] padded (rows 192..208)
WFC_OFF = WEMB_OFF + IN_SIZE    # [H, 128] padded       (rows 208..240)
SP_OFF = WFC_OFF + H            # [2L+2, 128] small params (rows 240..248)
SLAB_ROWS = SP_OFF + 2 * L + 2  # 248


# ------------------------------ math helpers ------------------------------
def _layer_norm(x, w, b):
    # PyTorch LayerNorm: biased variance over the last dim.
    mean = jnp.mean(x, axis=-1, keepdims=True)
    var = jnp.mean((x - mean) ** 2, axis=-1, keepdims=True)
    return (x - mean) * lax.rsqrt(var + EPS) * w + b


def _gelu_exact(x):
    # nn.GELU() default == exact erf form.
    return 0.5 * x * (1.0 + lax.erf(x * INV_SQRT2))


def _softmax_last(x):
    m = jnp.max(x, axis=-1, keepdims=True)
    p = jnp.exp(x - m)
    return p / jnp.sum(p, axis=-1, keepdims=True)


# -------------------------------- kernel ----------------------------------
# Small-parameter rows (slab rows SP_OFF .. SP_OFF+2L+2), each [4H] = [128]:
#   row l        (l < L) : [ ln1_w | ln1_b | ln2_w | ln2_b ]   (4 x H)
#   row L + l    (l < L) : b1[l]                               (4H)
#   row 2L               : [ b2[0] | b2[1] | b2[2] | b_emb ]   ((L+1) x H)
#   row 2L + 1           : [ b_fc | zeros ]                    (C + pad)
def _bi_attention_kernel(
    x_ref,       # [B*S, IN_SIZE]
    w_ref,       # [SLAB_ROWS, 4H]  packed weights + small params
    out_ref,     # [B*S, 4H]        lane-dense (logits in cols 0..C)
):
    sp = w_ref[SP_OFF:SP_OFF + 2 * L + 2, :]                 # [2L+2, 128]
    b_emb = sp[2 * L, L * H:(L + 1) * H]                     # [H]
    b_fc_row = sp[2 * L + 1, :]                              # [128] (zeros past C)

    x = x_ref[...]                                           # [B*S, IN]

    # embedding linear (whole batch at once)
    w_emb = w_ref[WEMB_OFF:WEMB_OFF + IN_SIZE, 0:H]          # [IN, H]
    h = jnp.dot(x, w_emb, preferred_element_type=jnp.float32) + b_emb   # [B*S, H]

    # block-diagonal mask: batches stay independent inside one [B*S, B*S] matmul
    row_blk = lax.broadcasted_iota(jnp.int32, (BS, BS), 0) >> LOG2_S
    col_blk = lax.broadcasted_iota(jnp.int32, (BS, BS), 1) >> LOG2_S
    block_mask = row_blk == col_blk                          # [B*S, B*S] bool

    # transformer blocks (static unrolled; dropout == identity)
    for l in range(L):
        ln1_w = sp[l, 0:H]
        ln1_b = sp[l, H:2 * H]
        ln2_w = sp[l, 2 * H:3 * H]
        ln2_b = sp[l, 3 * H:4 * H]
        b1 = sp[L + l, :]
        b2 = sp[2 * L, l * H:(l + 1) * H]

        # --- self attention: softmax(h h^T) h, one masked matmul for all batches ---
        scores = lax.dot_general(                            # h @ h^T, no XLU transpose
            h, h, (((1,), (1,)), ((), ())),
            preferred_element_type=jnp.float32)              # [B*S, B*S]
        scores = jnp.where(block_mask, scores, -1e30)        # mask BEFORE row-max
        attn = _softmax_last(scores)
        attended = jnp.dot(attn, h, preferred_element_type=jnp.float32)  # [B*S, H]
        h = _layer_norm(h + attended, ln1_w, ln1_b)

        # --- FFN: Linear(H,4H) -> GELU -> Linear(4H,H) (w2 pre-transposed) ---
        w1 = w_ref[W1_OFF + l * H:W1_OFF + (l + 1) * H, :]       # [H, 4H]
        w2t = w_ref[W2T_OFF + l * H:W2T_OFF + (l + 1) * H, :]    # [H, 4H]
        f = jnp.dot(h, w1, preferred_element_type=jnp.float32) + b1
        f = _gelu_exact(f)
        f = lax.dot_general(                                  # f @ w2  via  f · w2T
            f, w2t, (((1,), (1,)), ((), ())),
            preferred_element_type=jnp.float32) + b2          # [B*S, H]
        h = _layer_norm(h + f, ln2_w, ln2_b)

    # final classifier — lane-dense (128-wide) whole-batch store, sliced outside
    w_fc = w_ref[WFC_OFF:WFC_OFF + H, :]                      # [H, 128] zero-padded
    out = jnp.dot(h, w_fc, preferred_element_type=jnp.float32) + b_fc_row
    out_ref[...] = out.astype(out_ref.dtype)


# --------------------- one-time parameter packing (init) --------------------
def pack_params(p):
    """Build the single lane-dense weight slab. Call ONCE at init, not per forward."""
    rows = []
    for l in range(L):
        rows.append(p["w1"][l])                                           # [H, 4H]
    for l in range(L):
        rows.append(p["w2"][l].T)                                         # [H, 4H]
    rows.append(jnp.pad(p["w_emb"], ((0, 0), (0, 4 * H - H))))            # [IN, 128]
    rows.append(jnp.pad(p["w_fc"], ((0, 0), (0, 4 * H - C))))             # [H, 128]
    sp_rows = []
    for l in range(L):
        sp_rows.append(jnp.concatenate(
            [p["ln1_w"][l], p["ln1_b"][l], p["ln2_w"][l], p["ln2_b"][l]]))
    for l in range(L):
        sp_rows.append(p["b1"][l])
    sp_rows.append(jnp.concatenate([p["b2"][l] for l in range(L)] + [p["b_emb"][0]]))
    sp_rows.append(jnp.concatenate(
        [p["b_fc"][0], jnp.zeros((4 * H - C,), jnp.float32)]))
    rows.append(jnp.stack(sp_rows))                                       # [2L+2, 128]
    slab = jnp.concatenate(rows, axis=0)
    assert slab.shape == (SLAB_ROWS, 4 * H)
    return slab


# ------------------------------- wrapper -----------------------------------
def bi_attention_classifier_forward(x, wslab):
    """x: [B, S, IN_SIZE] f32, wslab: pre-packed [248,128] -> logits [B, S, C]."""
    x2 = x.reshape(B * S, IN_SIZE)          # free wrapper-side reshape
    out = pl.pallas_call(
        _bi_attention_kernel,
        out_shape=jax.ShapeDtypeStruct((B * S, 4 * H), jnp.float32),
        cost_estimate=pl.CostEstimate(
            flops=1_100_000, transcendentals=7_200, bytes_accessed=140_000),
    )(x2, wslab)
    return out[:, :C].reshape(B, S, C)


# -------------------------- reference (plain JAX) ---------------------------
def reference_forward(x, p):
    h = jnp.einsum("bsi,ih->bsh", x, p["w_emb"]) + p["b_emb"]
    for l in range(L):
        scores = jnp.einsum("bsh,bth->bst", h, h)
        attn = jax.nn.softmax(scores, axis=-1)
        attended = jnp.einsum("bst,bth->bsh", attn, h)
        h = _layer_norm(h + attended, p["ln1_w"][l], p["ln1_b"][l])
        f = jnp.einsum("bsh,hk->bsk", h, p["w1"][l]) + p["b1"][l]
        f = _gelu_exact(f)
        f = jnp.einsum("bsk,kh->bsh", f, p["w2"][l]) + p["b2"][l]
        h = _layer_norm(h + f, p["ln2_w"][l], p["ln2_b"][l])
    return jnp.einsum("bsh,hc->bsc", h, p["w_fc"]) + p["b_fc"]


# ----------------------------- param init -----------------------------------
def init_params(key):
    ks = jax.random.split(key, 8)

    def uni(k, shape, fan_in):
        bound = 1.0 / jnp.sqrt(fan_in)
        return jax.random.uniform(k, shape, jnp.float32, -bound, bound)

    return {
        # embedding linear (input_size -> hidden)
        "w_emb": uni(ks[0], (IN_SIZE, H), IN_SIZE),
        "b_emb": uni(ks[1], (1, H), IN_SIZE),
        # layer norms (PyTorch default: weight=1, bias=0)
        "ln1_w": jnp.ones((L, H), jnp.float32),
        "ln1_b": jnp.zeros((L, H), jnp.float32),
        "ln2_w": jnp.ones((L, H), jnp.float32),
        "ln2_b": jnp.zeros((L, H), jnp.float32),
        # FFN linears, stacked over layers
        "w1": uni(ks[2], (L, H, 4 * H), H),
        "b1": uni(ks[3], (L, 4 * H), H),
        "w2": uni(ks[4], (L, 4 * H, H), 4 * H),
        "b2": uni(ks[5], (L, H), 4 * H),
        # final classifier (hidden -> num_classes)
        "w_fc": uni(ks[6], (H, C), H),
        "b_fc": uni(ks[7], (1, C), H),
        # NOTE: TransformerBlock.attention (nn.Linear) is never used in the
        # PyTorch forward pass, so it has no kernel counterpart.
    }


if __name__ == "__main__":
    key = jax.random.PRNGKey(0)
    pkey, xkey = jax.random.split(key)
    params = init_params(pkey)
    wslab = jax.block_until_ready(pack_params(params))   # one-time layout work
    x = jax.random.normal(xkey, (B, S, IN_SIZE), jnp.float32)

    out = bi_attention_classifier_forward(x, wslab)
    out = jax.block_until_ready(out)

    ref = reference_forward(x, params)
    assert out.shape == (B, S, C)
    assert jnp.allclose(out, ref, atol=1e-4, rtol=1e-4), (
        f"max abs err {jnp.max(jnp.abs(out - ref))}")
    print("KERNEL_OK")
</pallas_src>

<mosaic_0001>
module attributes {stable_mosaic.version = 11 : i64} {
  func.func @_bi_attention_kernel(%arg0: memref<16x16xf32, #tpu.memory_space<vmem>>, %arg1: memref<248x128xf32, #tpu.memory_space<vmem>>, %arg2: memref<16x128xf32, #tpu.memory_space<vmem>>) attributes {dimension_semantics = [], scalar_prefetch = 0 : i64, scratch_operands = 0 : i64, tpu.core_type = #tpu.core_type<tc>} {
    %c240 = arith.constant 240 : index
    %c0 = arith.constant 0 : index
    %0 = vector.load %arg1[%c240, %c0] : memref<248x128xf32, #tpu.memory_space<vmem>>, vector<8x128xf32>
    %1 = vector.extract_strided_slice %0 {offsets = [6, 96], sizes = [1, 32], strides = [1, 1]} : vector<8x128xf32> to vector<1x32xf32>
    %2 = vector.shape_cast %1 : vector<1x32xf32> to vector<32xf32>
    %3 = vector.extract_strided_slice %0 {offsets = [7, 0], sizes = [1, 128], strides = [1, 1]} : vector<8x128xf32> to vector<1x128xf32>
    %4 = vector.shape_cast %3 : vector<1x128xf32> to vector<128xf32>
    %c0_0 = arith.constant 0 : index
    %c0_1 = arith.constant 0 : index
    %5 = vector.load %arg0[%c0_0, %c0_1] : memref<16x16xf32, #tpu.memory_space<vmem>>, vector<16x16xf32>
    %c192 = arith.constant 192 : index
    %c0_2 = arith.constant 0 : index
    %6 = vector.load %arg1[%c192, %c0_2] : memref<248x128xf32, #tpu.memory_space<vmem>>, vector<16x32xf32>
    %cst = arith.constant dense<0.000000e+00> : vector<16x32xf32>
    %7 = tpu.matmul %5, %6, %cst {dimension_numbers = #tpu.dot_dimension_numbers<[1], [0], [0], [1], [0, 0, 1, 1], [], []>} : vector<16x16xf32>, vector<16x32xf32>, vector<16x32xf32> -> vector<16x32xf32>
    %8 = vector.shape_cast %2 : vector<32xf32> to vector<1x32xf32>
    %9 = vector.broadcast %8 : vector<1x32xf32> to vector<16x32xf32>
    %10 = arith.addf %7, %9 : vector<16x32xf32>
    %11 = tpu.iota {dimensions = array<i32: 0>} : vector<16x16xi32>
    %c3_i32 = arith.constant 3 : i32
    %12 = vector.broadcast %c3_i32 : i32 to vector<16x16xi32>
    %13 = arith.shrsi %11, %12 : vector<16x16xi32>
    %14 = tpu.iota {dimensions = array<i32: 1>} : vector<16x16xi32>
    %c3_i32_3 = arith.constant 3 : i32
    %15 = vector.broadcast %c3_i32_3 : i32 to vector<16x16xi32>
    %16 = arith.shrsi %14, %15 : vector<16x16xi32>
    %17 = arith.cmpi eq, %13, %16 : vector<16x16xi32>
    %18 = vector.extract_strided_slice %0 {offsets = [0, 0], sizes = [1, 32], strides = [1, 1]} : vector<8x128xf32> to vector<1x32xf32>
    %19 = vector.shape_cast %18 : vector<1x32xf32> to vector<32xf32>
    %20 = vector.extract_strided_slice %0 {offsets = [0, 32], sizes = [1, 32], strides = [1, 1]} : vector<8x128xf32> to vector<1x32xf32>
    %21 = vector.shape_cast %20 : vector<1x32xf32> to vector<32xf32>
    %22 = vector.extract_strided_slice %0 {offsets = [0, 64], sizes = [1, 32], strides = [1, 1]} : vector<8x128xf32> to vector<1x32xf32>
    %23 = vector.shape_cast %22 : vector<1x32xf32> to vector<32xf32>
    %24 = vector.extract_strided_slice %0 {offsets = [0, 96], sizes = [1, 32], strides = [1, 1]} : vector<8x128xf32> to vector<1x32xf32>
    %25 = vector.shape_cast %24 : vector<1x32xf32> to vector<32xf32>
    %26 = vector.extract_strided_slice %0 {offsets = [3, 0], sizes = [1, 128], strides = [1, 1]} : vector<8x128xf32> to vector<1x128xf32>
    %27 = vector.shape_cast %26 : vector<1x128xf32> to vector<128xf32>
    %28 = vector.extract_strided_slice %0 {offsets = [6, 0], sizes = [1, 32], strides = [1, 1]} : vector<8x128xf32> to vector<1x32xf32>
    %29 = vector.shape_cast %28 : vector<1x32xf32> to vector<32xf32>
    %cst_4 = arith.constant dense<0.000000e+00> : vector<16x16xf32>
    %30 = tpu.matmul %10, %10, %cst_4 {dimension_numbers = #tpu.dot_dimension_numbers<[1], [1], [0], [0], [0, 0, 1, 0], [], []>} : vector<16x32xf32>, vector<16x32xf32>, vector<16x16xf32> -> vector<16x16xf32>
    %cst_5 = arith.constant -1.000000e+30 : f32
    %31 = vector.broadcast %cst_5 : f32 to vector<16x16xf32>
    %32 = arith.select %17, %30, %31 : vector<16x16xi1>, vector<16x16xf32>
    %cst_6 = arith.constant dense<0xFF800000> : vector<16xf32>
    %33 = vector.multi_reduction <maximumf>, %32, %cst_6 [1] : vector<16x16xf32> to vector<16xf32>
    %34 = vector.shape_cast %33 : vector<16xf32> to vector<16x1xf32>
    %35 = vector.broadcast %34 : vector<16x1xf32> to vector<16x16xf32>
    %36 = arith.subf %32, %35 : vector<16x16xf32>
    %37 = math.exp %36 : vector<16x16xf32>
    %cst_7 = arith.constant dense<0.000000e+00> : vector<16xf32>
    %38 = vector.multi_reduction <add>, %37, %cst_7 [1] : vector<16x16xf32> to vector<16xf32>
    %39 = vector.shape_cast %38 : vector<16xf32> to vector<16x1xf32>
    %40 = vector.broadcast %39 : vector<16x1xf32> to vector<16x16xf32>
    %41 = arith.divf %37, %40 : vector<16x16xf32>
    %cst_8 = arith.constant dense<0.000000e+00> : vector<16x32xf32>
    %42 = tpu.matmul %41, %10, %cst_8 {dimension_numbers = #tpu.dot_dimension_numbers<[1], [0], [0], [1], [0, 0, 1, 1], [], []>} : vector<16x16xf32>, vector<16x32xf32>, vector<16x32xf32> -> vector<16x32xf32>
    %43 = arith.addf %10, %42 : vector<16x32xf32>
    %cst_9 = arith.constant dense<0.000000e+00> : vector<16xf32>
    %44 = vector.multi_reduction <add>, %43, %cst_9 [1] : vector<16x32xf32> to vector<16xf32>
    %45 = vector.shape_cast %44 : vector<16xf32> to vector<16x1xf32>
    %cst_10 = arith.constant 3.200000e+01 : f32
    %46 = vector.broadcast %cst_10 : f32 to vector<16x1xf32>
    %47 = arith.divf %45, %46 : vector<16x1xf32>
    %48 = vector.broadcast %47 : vector<16x1xf32> to vector<16x32xf32>
    %49 = arith.subf %43, %48 : vector<16x32xf32>
    %50 = arith.mulf %49, %49 : vector<16x32xf32>
    %cst_11 = arith.constant dense<0.000000e+00> : vector<16xf32>
    %51 = vector.multi_reduction <add>, %50, %cst_11 [1] : vector<16x32xf32> to vector<16xf32>
    %52 = vector.shape_cast %51 : vector<16xf32> to vector<16x1xf32>
    %cst_12 = arith.constant 3.200000e+01 : f32
    %53 = vector.broadcast %cst_12 : f32 to vector<16x1xf32>
    %54 = arith.divf %52, %53 : vector<16x1xf32>
    %55 = vector.broadcast %47 : vector<16x1xf32> to vector<16x32xf32>
    %56 = arith.subf %43, %55 : vector<16x32xf32>
    %cst_13 = arith.constant 9.99999974E-6 : f32
    %57 = vector.broadcast %cst_13 : f32 to vector<16x1xf32>
    %58 = arith.addf %54, %57 : vector<16x1xf32>
    %59 = math.rsqrt %58 : vector<16x1xf32>
    %60 = vector.broadcast %59 : vector<16x1xf32> to vector<16x32xf32>
    %61 = arith.mulf %56, %60 : vector<16x32xf32>
    %62 = vector.shape_cast %19 : vector<32xf32> to vector<1x32xf32>
    %63 = vector.broadcast %62 : vector<1x32xf32> to vector<16x32xf32>
    %64 = arith.mulf %61, %63 : vector<16x32xf32>
    %65 = vector.shape_cast %21 : vector<32xf32> to vector<1x32xf32>
    %66 = vector.broadcast %65 : vector<1x32xf32> to vector<16x32xf32>
    %67 = arith.addf %64, %66 : vector<16x32xf32>
    %c0_14 = arith.constant 0 : index
    %c0_15 = arith.constant 0 : index
    %68 = vector.load %arg1[%c0_14, %c0_15] : memref<248x128xf32, #tpu.memory_space<vmem>>, vector<32x128xf32>
    %c96 = arith.constant 96 : index
    %c0_16 = arith.constant 0 : index
    %69 = vector.load %arg1[%c96, %c0_16] : memref<248x128xf32, #tpu.memory_space<vmem>>, vector<32x128xf32>
    %cst_17 = arith.constant dense<0.000000e+00> : vector<16x128xf32>
    %70 = tpu.matmul %67, %68, %cst_17 {dimension_numbers = #tpu.dot_dimension_numbers<[1], [0], [0], [1], [0, 0, 1, 1], [], []>} : vector<16x32xf32>, vector<32x128xf32>, vector<16x128xf32> -> vector<16x128xf32>
    %71 = vector.shape_cast %27 : vector<128xf32> to vector<1x128xf32>
    %72 = vector.broadcast %71 : vector<1x128xf32> to vector<16x128xf32>
    %73 = arith.addf %70, %72 : vector<16x128xf32>
    %cst_18 = arith.constant 5.000000e-01 : f32
    %74 = vector.broadcast %cst_18 : f32 to vector<16x128xf32>
    %75 = arith.mulf %74, %73 : vector<16x128xf32>
    %cst_19 = arith.constant 0.707106769 : f32
    %76 = vector.broadcast %cst_19 : f32 to vector<16x128xf32>
    %77 = arith.mulf %73, %76 : vector<16x128xf32>
    %78 = math.erf %77 : vector<16x128xf32>
    %cst_20 = arith.constant 1.000000e+00 : f32
    %79 = vector.broadcast %cst_20 : f32 to vector<16x128xf32>
    %80 = arith.addf %79, %78 : vector<16x128xf32>
    %81 = arith.mulf %75, %80 : vector<16x128xf32>
    %cst_21 = arith.constant dense<0.000000e+00> : vector<16x32xf32>
    %82 = tpu.matmul %81, %69, %cst_21 {dimension_numbers = #tpu.dot_dimension_numbers<[1], [1], [0], [0], [0, 0, 1, 0], [], []>} : vector<16x128xf32>, vector<32x128xf32>, vector<16x32xf32> -> vector<16x32xf32>
    %83 = vector.shape_cast %29 : vector<32xf32> to vector<1x32xf32>
    %84 = vector.broadcast %83 : vector<1x32xf32> to vector<16x32xf32>
    %85 = arith.addf %82, %84 : vector<16x32xf32>
    %86 = arith.addf %67, %85 : vector<16x32xf32>
    %cst_22 = arith.constant dense<0.000000e+00> : vector<16xf32>
    %87 = vector.multi_reduction <add>, %86, %cst_22 [1] : vector<16x32xf32> to vector<16xf32>
    %88 = vector.shape_cast %87 : vector<16xf32> to vector<16x1xf32>
    %cst_23 = arith.constant 3.200000e+01 : f32
    %89 = vector.broadcast %cst_23 : f32 to vector<16x1xf32>
    %90 = arith.divf %88, %89 : vector<16x1xf32>
    %91 = vector.broadcast %90 : vector<16x1xf32> to vector<16x32xf32>
    %92 = arith.subf %86, %91 : vector<16x32xf32>
    %93 = arith.mulf %92, %92 : vector<16x32xf32>
    %cst_24 = arith.constant dense<0.000000e+00> : vector<16xf32>
    %94 = vector.multi_reduction <add>, %93, %cst_24 [1] : vector<16x32xf32> to vector<16xf32>
    %95 = vector.shape_cast %94 : vector<16xf32> to vector<16x1xf32>
    %cst_25 = arith.constant 3.200000e+01 : f32
    %96 = vector.broadcast %cst_25 : f32 to vector<16x1xf32>
    %97 = arith.divf %95, %96 : vector<16x1xf32>
    %98 = vector.broadcast %90 : vector<16x1xf32> to vector<16x32xf32>
    %99 = arith.subf %86, %98 : vector<16x32xf32>
    %cst_26 = arith.constant 9.99999974E-6 : f32
    %100 = vector.broadcast %cst_26 : f32 to vector<16x1xf32>
    %101 = arith.addf %97, %100 : vector<16x1xf32>
    %102 = math.rsqrt %101 : vector<16x1xf32>
    %103 = vector.broadcast %102 : vector<16x1xf32> to vector<16x32xf32>
    %104 = arith.mulf %99, %103 : vector<16x32xf32>
    %105 = vector.shape_cast %23 : vector<32xf32> to vector<1x32xf32>
    %106 = vector.broadcast %105 : vector<1x32xf32> to vector<16x32xf32>
    %107 = arith.mulf %104, %106 : vector<16x32xf32>
    %108 = vector.shape_cast %25 : vector<32xf32> to vector<1x32xf32>
    %109 = vector.broadcast %108 : vector<1x32xf32> to vector<16x32xf32>
    %110 = arith.addf %107, %109 : vector<16x32xf32>
    %111 = vector.extract_strided_slice %0 {offsets = [1, 0], sizes = [1, 32], strides = [1, 1]} : vector<8x128xf32> to vector<1x32xf32>
    %112 = vector.shape_cast %111 : vector<1x32xf32> to vector<32xf32>
    %113 = vector.extract_strided_slice %0 {offsets = [1, 32], sizes = [1, 32], strides = [1, 1]} : vector<8x128xf32> to vector<1x32xf32>
    %114 = vector.shape_cast %113 : vector<1x32xf32> to vector<32xf32>
    %115 = vector.extract_strided_slice %0 {offsets = [1, 64], sizes = [1, 32], strides = [1, 1]} : vector<8x128xf32> to vector<1x32xf32>
    %116 = vector.shape_cast %115 : vector<1x32xf32> to vector<32xf32>
    %117 = vector.extract_strided_slice %0 {offsets = [1, 96], sizes = [1, 32], strides = [1, 1]} : vector<8x128xf32> to vector<1x32xf32>
    %118 = vector.shape_cast %117 : vector<1x32xf32> to vector<32xf32>
    %119 = vector.extract_strided_slice %0 {offsets = [4, 0], sizes = [1, 128], strides = [1, 1]} : vector<8x128xf32> to vector<1x128xf32>
    %120 = vector.shape_cast %119 : vector<1x128xf32> to vector<128xf32>
    %121 = vector.extract_strided_slice %0 {offsets = [6, 32], sizes = [1, 32], strides = [1, 1]} : vector<8x128xf32> to vector<1x32xf32>
    %122 = vector.shape_cast %121 : vector<1x32xf32> to vector<32xf32>
    %cst_27 = arith.constant dense<0.000000e+00> : vector<16x16xf32>
    %123 = tpu.matmul %110, %110, %cst_27 {dimension_numbers = #tpu.dot_dimension_numbers<[1], [1], [0], [0], [0, 0, 1, 0], [], []>} : vector<16x32xf32>, vector<16x32xf32>, vector<16x16xf32> -> vector<16x16xf32>
    %cst_28 = arith.constant -1.000000e+30 : f32
    %124 = vector.broadcast %cst_28 : f32 to vector<16x16xf32>
    %125 = arith.select %17, %123, %124 : vector<16x16xi1>, vector<16x16xf32>
    %cst_29 = arith.constant dense<0xFF800000> : vector<16xf32>
    %126 = vector.multi_reduction <maximumf>, %125, %cst_29 [1] : vector<16x16xf32> to vector<16xf32>
    %127 = vector.shape_cast %126 : vector<16xf32> to vector<16x1xf32>
    %128 = vector.broadcast %127 : vector<16x1xf32> to vector<16x16xf32>
    %129 = arith.subf %125, %128 : vector<16x16xf32>
    %130 = math.exp %129 : vector<16x16xf32>
    %cst_30 = arith.constant dense<0.000000e+00> : vector<16xf32>
    %131 = vector.multi_reduction <add>, %130, %cst_30 [1] : vector<16x16xf32> to vector<16xf32>
    %132 = vector.shape_cast %131 : vector<16xf32> to vector<16x1xf32>
    %133 = vector.broadcast %132 : vector<16x1xf32> to vector<16x16xf32>
    %134 = arith.divf %130, %133 : vector<16x16xf32>
    %cst_31 = arith.constant dense<0.000000e+00> : vector<16x32xf32>
    %135 = tpu.matmul %134, %110, %cst_31 {dimension_numbers = #tpu.dot_dimension_numbers<[1], [0], [0], [1], [0, 0, 1, 1], [], []>} : vector<16x16xf32>, vector<16x32xf32>, vector<16x32xf32> -> vector<16x32xf32>
    %136 = arith.addf %110, %135 : vector<16x32xf32>
    %cst_32 = arith.constant dense<0.000000e+00> : vector<16xf32>
    %137 = vector.multi_reduction <add>, %136, %cst_32 [1] : vector<16x32xf32> to vector<16xf32>
    %138 = vector.shape_cast %137 : vector<16xf32> to vector<16x1xf32>
    %cst_33 = arith.constant 3.200000e+01 : f32
    %139 = vector.broadcast %cst_33 : f32 to vector<16x1xf32>
    %140 = arith.divf %138, %139 : vector<16x1xf32>
    %141 = vector.broadcast %140 : vector<16x1xf32> to vector<16x32xf32>
    %142 = arith.subf %136, %141 : vector<16x32xf32>
    %143 = arith.mulf %142, %142 : vector<16x32xf32>
    %cst_34 = arith.constant dense<0.000000e+00> : vector<16xf32>
    %144 = vector.multi_reduction <add>, %143, %cst_34 [1] : vector<16x32xf32> to vector<16xf32>
    %145 = vector.shape_cast %144 : vector<16xf32> to vector<16x1xf32>
    %cst_35 = arith.constant 3.200000e+01 : f32
    %146 = vector.broadcast %cst_35 : f32 to vector<16x1xf32>
    %147 = arith.divf %145, %146 : vector<16x1xf32>
    %148 = vector.broadcast %140 : vector<16x1xf32> to vector<16x32xf32>
    %149 = arith.subf %136, %148 : vector<16x32xf32>
    %cst_36 = arith.constant 9.99999974E-6 : f32
    %150 = vector.broadcast %cst_36 : f32 to vector<16x1xf32>
    %151 = arith.addf %147, %150 : vector<16x1xf32>
    %152 = math.rsqrt %151 : vector<16x1xf32>
    %153 = vector.broadcast %152 : vector<16x1xf32> to vector<16x32xf32>
    %154 = arith.mulf %149, %153 : vector<16x32xf32>
    %155 = vector.shape_cast %112 : vector<32xf32> to vector<1x32xf32>
    %156 = vector.broadcast %155 : vector<1x32xf32> to vector<16x32xf32>
    %157 = arith.mulf %154, %156 : vector<16x32xf32>
    %158 = vector.shape_cast %114 : vector<32xf32> to vector<1x32xf32>
    %159 = vector.broadcast %158 : vector<1x32xf32> to vector<16x32xf32>
    %160 = arith.addf %157, %159 : vector<16x32xf32>
    %c32 = arith.constant 32 : index
    %c0_37 = arith.constant 0 : index
    %161 = vector.load %arg1[%c32, %c0_37] : memref<248x128xf32, #tpu.memory_space<vmem>>, vector<32x128xf32>
    %c128 = arith.constant 128 : index
    %c0_38 = arith.constant 0 : index
    %162 = vector.load %arg1[%c128, %c0_38] : memref<248x128xf32, #tpu.memory_space<vmem>>, vector<32x128xf32>
    %cst_39 = arith.constant dense<0.000000e+00> : vector<16x128xf32>
    %163 = tpu.matmul %160, %161, %cst_39 {dimension_numbers = #tpu.dot_dimension_numbers<[1], [0], [0], [1], [0, 0, 1, 1], [], []>} : vector<16x32xf32>, vector<32x128xf32>, vector<16x128xf32> -> vector<16x128xf32>
    %164 = vector.shape_cast %120 : vector<128xf32> to vector<1x128xf32>
    %165 = vector.broadcast %164 : vector<1x128xf32> to vector<16x128xf32>
    %166 = arith.addf %163, %165 : vector<16x128xf32>
    %cst_40 = arith.constant 5.000000e-01 : f32
    %167 = vector.broadcast %cst_40 : f32 to vector<16x128xf32>
    %168 = arith.mulf %167, %166 : vector<16x128xf32>
    %cst_41 = arith.constant 0.707106769 : f32
    %169 = vector.broadcast %cst_41 : f32 to vector<16x128xf32>
    %170 = arith.mulf %166, %169 : vector<16x128xf32>
    %171 = math.erf %170 : vector<16x128xf32>
    %cst_42 = arith.constant 1.000000e+00 : f32
    %172 = vector.broadcast %cst_42 : f32 to vector<16x128xf32>
    %173 = arith.addf %172, %171 : vector<16x128xf32>
    %174 = arith.mulf %168, %173 : vector<16x128xf32>
    %cst_43 = arith.constant dense<0.000000e+00> : vector<16x32xf32>
    %175 = tpu.matmul %174, %162, %cst_43 {dimension_numbers = #tpu.dot_dimension_numbers<[1], [1], [0], [0], [0, 0, 1, 0], [], []>} : vector<16x128xf32>, vector<32x128xf32>, vector<16x32xf32> -> vector<16x32xf32>
    %176 = vector.shape_cast %122 : vector<32xf32> to vector<1x32xf32>
    %177 = vector.broadcast %176 : vector<1x32xf32> to vector<16x32xf32>
    %178 = arith.addf %175, %177 : vector<16x32xf32>
    %179 = arith.addf %160, %178 : vector<16x32xf32>
    %cst_44 = arith.constant dense<0.000000e+00> : vector<16xf32>
    %180 = vector.multi_reduction <add>, %179, %cst_44 [1] : vector<16x32xf32> to vector<16xf32>
    %181 = vector.shape_cast %180 : vector<16xf32> to vector<16x1xf32>
    %cst_45 = arith.constant 3.200000e+01 : f32
    %182 = vector.broadcast %cst_45 : f32 to vector<16x1xf32>
    %183 = arith.divf %181, %182 : vector<16x1xf32>
    %184 = vector.broadcast %183 : vector<16x1xf32> to vector<16x32xf32>
    %185 = arith.subf %179, %184 : vector<16x32xf32>
    %186 = arith.mulf %185, %185 : vector<16x32xf32>
    %cst_46 = arith.constant dense<0.000000e+00> : vector<16xf32>
    %187 = vector.multi_reduction <add>, %186, %cst_46 [1] : vector<16x32xf32> to vector<16xf32>
    %188 = vector.shape_cast %187 : vector<16xf32> to vector<16x1xf32>
    %cst_47 = arith.constant 3.200000e+01 : f32
    %189 = vector.broadcast %cst_47 : f32 to vector<16x1xf32>
    %190 = arith.divf %188, %189 : vector<16x1xf32>
    %191 = vector.broadcast %183 : vector<16x1xf32> to vector<16x32xf32>
    %192 = arith.subf %179, %191 : vector<16x32xf32>
    %cst_48 = arith.constant 9.99999974E-6 : f32
    %193 = vector.broadcast %cst_48 : f32 to vector<16x1xf32>
    %194 = arith.addf %190, %193 : vector<16x1xf32>
    %195 = math.rsqrt %194 : vector<16x1xf32>
    %196 = vector.broadcast %195 : vector<16x1xf32> to vector<16x32xf32>
    %197 = arith.mulf %192, %196 : vector<16x32xf32>
    %198 = vector.shape_cast %116 : vector<32xf32> to vector<1x32xf32>
    %199 = vector.broadcast %198 : vector<1x32xf32> to vector<16x32xf32>
    %200 = arith.mulf %197, %199 : vector<16x32xf32>
    %201 = vector.shape_cast %118 : vector<32xf32> to vector<1x32xf32>
    %202 = vector.broadcast %201 : vector<1x32xf32> to vector<16x32xf32>
    %203 = arith.addf %200, %202 : vector<16x32xf32>
    %204 = vector.extract_strided_slice %0 {offsets = [2, 0], sizes = [1, 32], strides = [1, 1]} : vector<8x128xf32> to vector<1x32xf32>
    %205 = vector.shape_cast %204 : vector<1x32xf32> to vector<32xf32>
    %206 = vector.extract_strided_slice %0 {offsets = [2, 32], sizes = [1, 32], strides = [1, 1]} : vector<8x128xf32> to vector<1x32xf32>
    %207 = vector.shape_cast %206 : vector<1x32xf32> to vector<32xf32>
    %208 = vector.extract_strided_slice %0 {offsets = [2, 64], sizes = [1, 32], strides = [1, 1]} : vector<8x128xf32> to vector<1x32xf32>
    %209 = vector.shape_cast %208 : vector<1x32xf32> to vector<32xf32>
    %210 = vector.extract_strided_slice %0 {offsets = [2, 96], sizes = [1, 32], strides = [1, 1]} : vector<8x128xf32> to vector<1x32xf32>
    %211 = vector.shape_cast %210 : vector<1x32xf32> to vector<32xf32>
    %212 = vector.extract_strided_slice %0 {offsets = [5, 0], sizes = [1, 128], strides = [1, 1]} : vector<8x128xf32> to vector<1x128xf32>
    %213 = vector.shape_cast %212 : vector<1x128xf32> to vector<128xf32>
    %214 = vector.extract_strided_slice %0 {offsets = [6, 64], sizes = [1, 32], strides = [1, 1]} : vector<8x128xf32> to vector<1x32xf32>
    %215 = vector.shape_cast %214 : vector<1x32xf32> to vector<32xf32>
    %cst_49 = arith.constant dense<0.000000e+00> : vector<16x16xf32>
    %216 = tpu.matmul %203, %203, %cst_49 {dimension_numbers = #tpu.dot_dimension_numbers<[1], [1], [0], [0], [0, 0, 1, 0], [], []>} : vector<16x32xf32>, vector<16x32xf32>, vector<16x16xf32> -> vector<16x16xf32>
    %cst_50 = arith.constant -1.000000e+30 : f32
    %217 = vector.broadcast %cst_50 : f32 to vector<16x16xf32>
    %218 = arith.select %17, %216, %217 : vector<16x16xi1>, vector<16x16xf32>
    %cst_51 = arith.constant dense<0xFF800000> : vector<16xf32>
    %219 = vector.multi_reduction <maximumf>, %218, %cst_51 [1] : vector<16x16xf32> to vector<16xf32>
    %220 = vector.shape_cast %219 : vector<16xf32> to vector<16x1xf32>
    %221 = vector.broadcast %220 : vector<16x1xf32> to vector<16x16xf32>
    %222 = arith.subf %218, %221 : vector<16x16xf32>
    %223 = math.exp %222 : vector<16x16xf32>
    %cst_52 = arith.constant dense<0.000000e+00> : vector<16xf32>
    %224 = vector.multi_reduction <add>, %223, %cst_52 [1] : vector<16x16xf32> to vector<16xf32>
    %225 = vector.shape_cast %224 : vector<16xf32> to vector<16x1xf32>
    %226 = vector.broadcast %225 : vector<16x1xf32> to vector<16x16xf32>
    %227 = arith.divf %223, %226 : vector<16x16xf32>
    %cst_53 = arith.constant dense<0.000000e+00> : vector<16x32xf32>
    %228 = tpu.matmul %227, %203, %cst_53 {dimension_numbers = #tpu.dot_dimension_numbers<[1], [0], [0], [1], [0, 0, 1, 1], [], []>} : vector<16x16xf32>, vector<16x32xf32>, vector<16x32xf32> -> vector<16x32xf32>
    %229 = arith.addf %203, %228 : vector<16x32xf32>
    %cst_54 = arith.constant dense<0.000000e+00> : vector<16xf32>
    %230 = vector.multi_reduction <add>, %229, %cst_54 [1] : vector<16x32xf32> to vector<16xf32>
    %231 = vector.shape_cast %230 : vector<16xf32> to vector<16x1xf32>
    %cst_55 = arith.constant 3.200000e+01 : f32
    %232 = vector.broadcast %cst_55 : f32 to vector<16x1xf32>
    %233 = arith.divf %231, %232 : vector<16x1xf32>
    %234 = vector.broadcast %233 : vector<16x1xf32> to vector<16x32xf32>
    %235 = arith.subf %229, %234 : vector<16x32xf32>
    %236 = arith.mulf %235, %235 : vector<16x32xf32>
    %cst_56 = arith.constant dense<0.000000e+00> : vector<16xf32>
    %237 = vector.multi_reduction <add>, %236, %cst_56 [1] : vector<16x32xf32> to vector<16xf32>
    %238 = vector.shape_cast %237 : vector<16xf32> to vector<16x1xf32>
    %cst_57 = arith.constant 3.200000e+01 : f32
    %239 = vector.broadcast %cst_57 : f32 to vector<16x1xf32>
    %240 = arith.divf %238, %239 : vector<16x1xf32>
    %241 = vector.broadcast %233 : vector<16x1xf32> to vector<16x32xf32>
    %242 = arith.subf %229, %241 : vector<16x32xf32>
    %cst_58 = arith.constant 9.99999974E-6 : f32
    %243 = vector.broadcast %cst_58 : f32 to vector<16x1xf32>
    %244 = arith.addf %240, %243 : vector<16x1xf32>
    %245 = math.rsqrt %244 : vector<16x1xf32>
    %246 = vector.broadcast %245 : vector<16x1xf32> to vector<16x32xf32>
    %247 = arith.mulf %242, %246 : vector<16x32xf32>
    %248 = vector.shape_cast %205 : vector<32xf32> to vector<1x32xf32>
    %249 = vector.broadcast %248 : vector<1x32xf32> to vector<16x32xf32>
    %250 = arith.mulf %247, %249 : vector<16x32xf32>
    %251 = vector.shape_cast %207 : vector<32xf32> to vector<1x32xf32>
    %252 = vector.broadcast %251 : vector<1x32xf32> to vector<16x32xf32>
    %253 = arith.addf %250, %252 : vector<16x32xf32>
    %c64 = arith.constant 64 : index
    %c0_59 = arith.constant 0 : index
    %254 = vector.load %arg1[%c64, %c0_59] : memref<248x128xf32, #tpu.memory_space<vmem>>, vector<32x128xf32>
    %c160 = arith.constant 160 : index
    %c0_60 = arith.constant 0 : index
    %255 = vector.load %arg1[%c160, %c0_60] : memref<248x128xf32, #tpu.memory_space<vmem>>, vector<32x128xf32>
    %cst_61 = arith.constant dense<0.000000e+00> : vector<16x128xf32>
    %256 = tpu.matmul %253, %254, %cst_61 {dimension_numbers = #tpu.dot_dimension_numbers<[1], [0], [0], [1], [0, 0, 1, 1], [], []>} : vector<16x32xf32>, vector<32x128xf32>, vector<16x128xf32> -> vector<16x128xf32>
    %257 = vector.shape_cast %213 : vector<128xf32> to vector<1x128xf32>
    %258 = vector.broadcast %257 : vector<1x128xf32> to vector<16x128xf32>
    %259 = arith.addf %256, %258 : vector<16x128xf32>
    %cst_62 = arith.constant 5.000000e-01 : f32
    %260 = vector.broadcast %cst_62 : f32 to vector<16x128xf32>
    %261 = arith.mulf %260, %259 : vector<16x128xf32>
    %cst_63 = arith.constant 0.707106769 : f32
    %262 = vector.broadcast %cst_63 : f32 to vector<16x128xf32>
    %263 = arith.mulf %259, %262 : vector<16x128xf32>
    %264 = math.erf %263 : vector<16x128xf32>
    %cst_64 = arith.constant 1.000000e+00 : f32
    %265 = vector.broadcast %cst_64 : f32 to vector<16x128xf32>
    %266 = arith.addf %265, %264 : vector<16x128xf32>
    %267 = arith.mulf %261, %266 : vector<16x128xf32>
    %cst_65 = arith.constant dense<0.000000e+00> : vector<16x32xf32>
    %268 = tpu.matmul %267, %255, %cst_65 {dimension_numbers = #tpu.dot_dimension_numbers<[1], [1], [0], [0], [0, 0, 1, 0], [], []>} : vector<16x128xf32>, vector<32x128xf32>, vector<16x32xf32> -> vector<16x32xf32>
    %269 = vector.shape_cast %215 : vector<32xf32> to vector<1x32xf32>
    %270 = vector.broadcast %269 : vector<1x32xf32> to vector<16x32xf32>
    %271 = arith.addf %268, %270 : vector<16x32xf32>
    %272 = arith.addf %253, %271 : vector<16x32xf32>
    %cst_66 = arith.constant dense<0.000000e+00> : vector<16xf32>
    %273 = vector.multi_reduction <add>, %272, %cst_66 [1] : vector<16x32xf32> to vector<16xf32>
    %274 = vector.shape_cast %273 : vector<16xf32> to vector<16x1xf32>
    %cst_67 = arith.constant 3.200000e+01 : f32
    %275 = vector.broadcast %cst_67 : f32 to vector<16x1xf32>
    %276 = arith.divf %274, %275 : vector<16x1xf32>
    %277 = vector.broadcast %276 : vector<16x1xf32> to vector<16x32xf32>
    %278 = arith.subf %272, %277 : vector<16x32xf32>
    %279 = arith.mulf %278, %278 : vector<16x32xf32>
    %cst_68 = arith.constant dense<0.000000e+00> : vector<16xf32>
    %280 = vector.multi_reduction <add>, %279, %cst_68 [1] : vector<16x32xf32> to vector<16xf32>
    %281 = vector.shape_cast %280 : vector<16xf32> to vector<16x1xf32>
    %cst_69 = arith.constant 3.200000e+01 : f32
    %282 = vector.broadcast %cst_69 : f32 to vector<16x1xf32>
    %283 = arith.divf %281, %282 : vector<16x1xf32>
    %284 = vector.broadcast %276 : vector<16x1xf32> to vector<16x32xf32>
    %285 = arith.subf %272, %284 : vector<16x32xf32>
    %cst_70 = arith.constant 9.99999974E-6 : f32
    %286 = vector.broadcast %cst_70 : f32 to vector<16x1xf32>
    %287 = arith.addf %283, %286 : vector<16x1xf32>
    %288 = math.rsqrt %287 : vector<16x1xf32>
    %289 = vector.broadcast %288 : vector<16x1xf32> to vector<16x32xf32>
    %290 = arith.mulf %285, %289 : vector<16x32xf32>
    %291 = vector.shape_cast %209 : vector<32xf32> to vector<1x32xf32>
    %292 = vector.broadcast %291 : vector<1x32xf32> to vector<16x32xf32>
    %293 = arith.mulf %290, %292 : vector<16x32xf32>
    %294 = vector.shape_cast %211 : vector<32xf32> to vector<1x32xf32>
    %295 = vector.broadcast %294 : vector<1x32xf32> to vector<16x32xf32>
    %296 = arith.addf %293, %295 : vector<16x32xf32>
    %c208 = arith.constant 208 : index
    %c0_71 = arith.constant 0 : index
    %297 = vector.load %arg1[%c208, %c0_71] : memref<248x128xf32, #tpu.memory_space<vmem>>, vector<32x128xf32>
    %cst_72 = arith.constant dense<0.000000e+00> : vector<16x128xf32>
    %298 = tpu.matmul %296, %297, %cst_72 {dimension_numbers = #tpu.dot_dimension_numbers<[1], [0], [0], [1], [0, 0, 1, 1], [], []>} : vector<16x32xf32>, vector<32x128xf32>, vector<16x128xf32> -> vector<16x128xf32>
    %299 = vector.shape_cast %4 : vector<128xf32> to vector<1x128xf32>
    %300 = vector.broadcast %299 : vector<1x128xf32> to vector<16x128xf32>
    %301 = arith.addf %298, %300 : vector<16x128xf32>
    %c0_73 = arith.constant 0 : index
    %c0_74 = arith.constant 0 : index
    %302 = vector.load %arg2[%c0_73, %c0_74] : memref<16x128xf32, #tpu.memory_space<vmem>>, vector<16x128xf32>
    tpu.vector_store %arg2[%c0_73, %c0_74], %301 {strides = array<i32>} : memref<16x128xf32, #tpu.memory_space<vmem>>, vector<16x128xf32>,
    return
  }
}

</mosaic_0001>

<llo_original>
// kernel: tpu_custom_call.1
$region0: #{tpu_custom_call.1}
  #allocation0 [shape = 'u32[]', space=smem, size = 0x4, offset = 0x4, fixed_abs, tag = 'smem constant byte address 0x4 - core index']
  #allocation1 [shape = 'u32[144,128]{1,0:T(1,128)}', space=vmem, size = 0x12000, scoped, tag = 'internal scratch']
  %s0 = inlined_call_operand.hbm [shape: f32[16,16], index: 0, kind: input, shape index: {}]
  %s1 = inlined_call_operand.hbm [shape: f32[248,128], index: 1, kind: input, shape index: {}]
  %s2 = inlined_call_operand.hbm [shape: f32[16,128], index: 2, kind: output, shape index: {}]
  %s3 = sld [smem:[#allocation0]]
  $region26: #{tpu_custom_call.1} parent=0
    _
  %s5 = ssub.s32 1, %s3
  %s6 = scalar_select 0, %s5, %s3
  $region1: #{tpu_custom_call.1} parent=0
    #allocation2 [shape = 'u8[8192]{0}', space=vmem, size = 0x2000, scoped, tag = 'input window, operand 0, single buffered']
    #allocation3 [shape = 's32[1]{0}', space=sflag, size = 0x4, scoped, tag = 'scoped memory for tpu_custom_call.1']
    #allocation4 [shape = 's32[1]{0}', space=sflag, size = 0x4, scoped, tag = 'scoped memory for tpu_custom_call.1']
    #allocation5 [shape = 'u8[126976]{0}', space=vmem, size = 0x1f000, scoped, tag = 'input window, operand 1, single buffered']
    #allocation6 [shape = 's32[1]{0}', space=sflag, size = 0x4, scoped, tag = 'scoped memory for tpu_custom_call.1']
    #allocation7 [shape = 'u8[8192]{0}', space=vmem, size = 0x2000, scoped, tag = 'output window, operand 0, single buffered']
    %7 = vsyncpa [#allocation3], 0
    %8 = vsyncpa [#allocation6], 0
    %9 = vsyncpa [#allocation4], 0
    // Predicated region
    $region2: #{tpu_custom_call.1} parent=1 // pred_check
      _
    $region3: #{tpu_custom_call.1} parent=1 // pred_check_branch
      %11 = sbr.rel (0) target = $region5
    $region4: #{tpu_custom_call.1} parent=1 // pred_region
      %s13 = ssub.s32 256, 256
      %14 = vsyncadd [#allocation3], %s13
      %s15 = sshll.u32 [#allocation2], 4
      %s16 = int_to_ptr.vmem [resolvable:$true] %s15
      %21 = dma.hbm_to_vmem [thread:$0]  %s0, 256, %s16, [#allocation3], 128, 128, 8
    $region5: #{tpu_custom_call.1} parent=1 // pred_fallthru
      _
    // Predicated region
    $region6: #{tpu_custom_call.1} parent=1 // pred_check
      _
    $region7: #{tpu_custom_call.1} parent=1 // pred_check_branch
      %23 = sbr.rel (0) target = $region9
    $region8: #{tpu_custom_call.1} parent=1 // pred_region
      %s25 = ssub.s32 3968, 3968
      %26 = vsyncadd [#allocation6], %s25
      %s27 = sshll.u32 [#allocation5], 4
      %s28 = int_to_ptr.vmem [resolvable:$true] %s27
      %33 = dma.hbm_to_vmem [thread:$0]  %s1, 3968, %s28, [#allocation6], 128, 128, 8
    $region9: #{tpu_custom_call.1} parent=1 // pred_fallthru
      _
    // Predicated region
    $region10: #{tpu_custom_call.1} parent=1 // pred_check
      _
    $region11: #{tpu_custom_call.1} parent=1 // pred_check_branch
      %35 = sbr.rel (0) target = $region13
    $region12: #{tpu_custom_call.1} parent=1 // pred_region
      %36 = dma.done [#allocation3], 256
    $region13: #{tpu_custom_call.1} parent=1 // pred_fallthru
      _
    // Predicated region
    $region14: #{tpu_custom_call.1} parent=1 // pred_check
      _
    $region15: #{tpu_custom_call.1} parent=1 // pred_check_branch
      %38 = sbr.rel (0) target = $region17
    $region16: #{tpu_custom_call.1} parent=1 // pred_region
      %39 = dma.done [#allocation6], 3968
    $region17: #{tpu_custom_call.1} parent=1 // pred_fallthru
      _
    %v40 = vld [vmem:[#allocation5 + $0xf0] sm:$0xff]
    %v41 = vld [vmem:[#allocation2] sm:$0xff]
    %v42 = vld [vmem:[#allocation2 + $0x8] sm:$0xff]
    %v43 = vld [vmem:[#allocation5 + $0xc0] sm:$0xff]
    %v44 = vld [vmem:[#allocation5 + $0xc8] sm:$0xff]
    %v45 = vlaneseq
    %v46 = vshrl.u32 %v45, 7
    %v47 = vsub.s32 6, %v46
    %v48 = vrot.slane %v40, %v47
    %50 = vrot.lane.b32.xlu0 %v48, 32
    %v51 = vpop.permute.xlu0 %50
    %vm53 = vcmask 130048
    %v55 = vsel %vm53, %v41, 0
    %v58 = vsel %vm53, %v42, 0
    %60 = vmatprep.subr.mxu0 0.0
    %61 = vmatpush1.msra.mxu0 %v43
    %62 = vmatprep.subr.mxu0 0.0
    %63 = vmatpush1.msra.mxu0 %v44
    %64 = vmatprep.subr.mxu0 0.0
    %65 = vmatpush1.msra.mxu0 0.0
    %66 = vmatprep.subr.mxu0 0.0
    %67 = vmatpush1.msra.mxu0 0.0
    %68 = vmatprep.subr.mxu0 0.0
    %69 = vmatpush1.msra.mxu0 0.0
    %70 = vmatprep.subr.mxu0 0.0
    %71 = vmatpush1.msra.mxu0 0.0
    %72 = vmatprep.subr.mxu0 0.0
    %73 = vmatpush1.msra.mxu0 0.0
    %74 = vmatprep.subr.mxu0 0.0
    %75 = vmatpush1.msra.mxu0 0.0
    %76 = vmatprep.subr.mxu0 0.0
    %77 = vmatpush1.msra.mxu0 0.0
    %78 = vmatprep.subr.mxu0 0.0
    %79 = vmatpush1.msra.mxu0 0.0
    %80 = vmatprep.subr.mxu0 0.0
    %81 = vmatpush1.msra.mxu0 0.0
    %82 = vmatprep.subr.mxu0 0.0
    %83 = vmatpush1.msra.mxu0 0.0
    %84 = vmatprep.subr.mxu0 0.0
    %85 = vmatpush1.msra.mxu0 0.0
    %86 = vmatprep.subr.mxu0 0.0
    %87 = vmatpush1.msra.mxu0 0.0
    %88 = vmatprep.subr.mxu0 0.0
    %89 = vmatpush1.msra.mxu0 0.0
    %90 = vmatprep.subr.mxu0 0.0
    %91 = vmatpush1.msra.mxu0 0.0
    %92 = vmatprep.subr.mxu0 0.0
    %93 = vmatpush1.msra.mxu0 0.0
    %94 = vmatprep.subr.mxu0 0.0
    %95 = vmatpush1.msra.mxu0 0.0
    %96 = vmatprep.subr.mxu0 0.0
    %97 = vmatpush1.msra.mxu0 0.0
    %98 = vmatprep.subr.mxu0 0.0
    %99 = vmatpush1.msra.mxu0 0.0
    %100 = vmatprep.subr.mxu0 0.0
    %101 = vmatpush1.msra.mxu0 0.0
    %102 = vmatprep.subr.mxu0 0.0
    %103 = vmatpush1.msra.mxu0 0.0
    %104 = vmatprep.subr.mxu0 0.0
    %105 = vmatpush1.msra.mxu0 0.0
    %106 = vmatprep.subr.mxu0 0.0
    %107 = vmatpush1.msra.mxu0 0.0
    %108 = vmatprep.subr.mxu0 0.0
    %109 = vmatpush1.msra.mxu0 0.0
    %110 = vmatprep.subr.mxu0 0.0
    %111 = vmatpush1.msra.mxu0 0.0
    %112 = vmatprep.subr.mxu0 0.0
    %113 = vmatpush1.msra.mxu0 0.0
    %114 = vmatprep.subr.mxu0 0.0
    %115 = vmatpush1.msra.mxu0 0.0
    %116 = vmatprep.subr.mxu0 0.0
    %117 = vmatpush1.msra.mxu0 0.0
    %118 = vmatprep.subr.mxu0 0.0
    %119 = vmatpush1.msra.mxu0 0.0
    %120 = vmatprep.subr.mxu0 0.0
    %121 = vmatpush1.msra.mxu0 0.0
    %122 = vmatprep.subr.mxu0 0.0
    %123 = vmatpush1.msra.mxu0 0.0
    %124 = vmatprep.mubr.f32.mxu0 0.0
    %125 = vmatmul.mubr.f32.gmra.mrb[0].mxu0 %v55
    %v126 = vpop.f32.mrb[0].mxu0
    %v127 = vadd.f32 %v51, %v126
    %v128 = vpop.f32.mrb[0].mxu0
    %129 = vmatprep.mubr.f32.mxu0 0.0
    %130 = vmatmul.mubr.f32.gmra.mrb[0].mxu0 %v58
    %v131 = vpop.f32.mrb[0].mxu0
    %v132 = vadd.f32 %v51, %v131
    %v133 = vpop.f32.mrb[0].mxu0
    %134 = vdwg.mxu0
    %v135 = vlaneseq
    %v136 = vshrl.u32 %v135, 7
    %v137 = vadd.s32 %v136, 8
    %v138 = vshra.s32 %v136, 3
    %v139 = vshra.s32 %v137, 3
    %v140 = vlaneseq
    %v141 = vand.u32 %v140, 127
    %v142 = vshra.s32 %v141, 3
    %vm143 = vcmp.eq.s32.totalorder %v138, %v142
    %vm144 = vcmp.eq.s32.totalorder %v139, %v142
    %vm145 = vcmask 261120
    %v147 = vsel %vm145, %v127, 0
    %v150 = vsel %vm145, %v132, 0
    %152 = vmatprep.subr.mxu0 0.0
    %153 = vmatpush1.xpose.msra.mxu0 %v147
    %154 = vmatprep.subr.mxu0 0.0
    %155 = vmatpush1.xpose.msra.mxu0 %v150
    %156 = vmatprep.subr.mxu0 0.0
    %157 = vmatpush1.xpose.msra.mxu0 0.0
    %158 = vmatprep.subr.mxu0 0.0
    %159 = vmatpush1.xpose.msra.mxu0 0.0
    %160 = vmatprep.subr.mxu0 0.0
    %161 = vmatpush1.xpose.msra.mxu0 0.0
    %162 = vmatprep.subr.mxu0 0.0
    %163 = vmatpush1.xpose.msra.mxu0 0.0
    %164 = vmatprep.subr.mxu0 0.0
    %165 = vmatpush1.xpose.msra.mxu0 0.0
    %166 = vmatprep.subr.mxu0 0.0
    %167 = vmatpush1.xpose.msra.mxu0 0.0
    %168 = vmatprep.subr.mxu0 0.0
    %169 = vmatpush1.xpose.msra.mxu0 0.0
    %170 = vmatprep.subr.mxu0 0.0
    %171 = vmatpush1.xpose.msra.mxu0 0.0
    %172 = vmatprep.subr.mxu0 0.0
    %173 = vmatpush1.xpose.msra.mxu0 0.0
    %174 = vmatprep.subr.mxu0 0.0
    %175 = vmatpush1.xpose.msra.mxu0 0.0
    %176 = vmatprep.subr.mxu0 0.0
    %177 = vmatpush1.xpose.msra.mxu0 0.0
    %178 = vmatprep.subr.mxu0 0.0
    %179 = vmatpush1.xpose.msra.mxu0 0.0
    %180 = vmatprep.subr.mxu0 0.0
    %181 = vmatpush1.xpose.msra.mxu0 0.0
    %182 = vmatprep.subr.mxu0 0.0
    %183 = vmatpush1.xpose.msra.mxu0 0.0
    %184 = vmatprep.subr.mxu0 0.0
    %185 = vmatpush1.xpose.msra.mxu0 0.0
    %186 = vmatprep.subr.mxu0 0.0
    %187 = vmatpush1.xpose.msra.mxu0 0.0
    %188 = vmatprep.subr.mxu0 0.0
    %189 = vmatpush1.xpose.msra.mxu0 0.0
    %190 = vmatprep.subr.mxu0 0.0
    %191 = vmatpush1.xpose.msra.mxu0 0.0
    %192 = vmatprep.subr.mxu0 0.0
    %193 = vmatpush1.xpose.msra.mxu0 0.0
    %194 = vmatprep.subr.mxu0 0.0
    %195 = vmatpush1.xpose.msra.mxu0 0.0
    %196 = vmatprep.subr.mxu0 0.0
    %197 = vmatpush1.xpose.msra.mxu0 0.0
    %198 = vmatprep.subr.mxu0 0.0
    %199 = vmatpush1.xpose.msra.mxu0 0.0
    %200 = vmatprep.subr.mxu0 0.0
    %201 = vmatpush1.xpose.msra.mxu0 0.0
    %202 = vmatprep.subr.mxu0 0.0
    %203 = vmatpush1.xpose.msra.mxu0 0.0
    %204 = vmatprep.subr.mxu0 0.0
    %205 = vmatpush1.xpose.msra.mxu0 0.0
    %206 = vmatprep.subr.mxu0 0.0
    %207 = vmatpush1.xpose.msra.mxu0 0.0
    %208 = vmatprep.subr.mxu0 0.0
    %209 = vmatpush1.xpose.msra.mxu0 0.0
    %210 = vmatprep.subr.mxu0 0.0
    %211 = vmatpush1.xpose.msra.mxu0 0.0
    %212 = vmatprep.subr.mxu0 0.0
    %213 = vmatpush1.xpose.msra.mxu0 0.0
    %214 = vmatprep.subr.mxu0 0.0
    %215 = vmatpush1.xpose.msra.mxu0 0.0
    %216 = vmatprep.mubr.f32.mxu0 0.0
    %217 = vmatmul.mubr.f32.gmra.mrb[0].mxu0 %v147
    %v218 = vpop.f32.mrb[0].mxu0
    %v219 = vadd.f32 0.0, %v218
    %v220 = vpop.f32.mrb[0].mxu0
    %221 = vmatprep.mubr.f32.mxu0 0.0
    %222 = vmatmul.mubr.f32.gmra.mrb[0].mxu0 %v150
    %v223 = vpop.f32.mrb[0].mxu0
    %v224 = vadd.f32 0.0, %v223
    %v225 = vpop.f32.mrb[0].mxu0
    %226 = vdwg.mxu0
    %v227 = vsel %vm143, %v219, -1e+30
    %v228 = vsel %vm144, %v224, -1e+30
    %v229 = vsel %vm53, %v227, -inf
    %230 = vmax.xlane.f32.xlu0 %v229
    %v231 = vpop.xlane.xlu0 %230
    %v232 = vsel %vm53, %v228, -inf
    %233 = vmax.xlane.f32.xlu0 %v232
    %v234 = vpop.xlane.xlu0 %233
    %v235 = vsub.f32 %v227, %v231
    %v236 = vsub.f32 %v228, %v234
    %v237 = vmul.f32 %v235, 1.442695
    %v238 = vpow.pop %v237
    %v239 = vmul.f32 %v236, 1.442695
    %v240 = vpow.pop %v239
    %v241 = vsel %vm53, %v238, 0.0
    %242 = vadd.xlane.f32.xlu0 %v241
    %v243 = vpop.xlane.xlu0 %242
    %v244 = vsel %vm53, %v240, 0.0
    %245 = vadd.xlane.f32.xlu0 %v244
    %v246 = vpop.xlane.xlu0 %245
    %v247 = vrcp.pop %v243
    %v248 = vmul.f32 %v238, %v247
    %v249 = vrcp.pop %v246
    %v250 = vmul.f32 %v240, %v249
    %v252 = vsel %vm53, %v248, 0
    %v255 = vsel %vm53, %v250, 0
    %257 = vmatprep.subr.mxu0 0.0
    %258 = vmatpush1.msra.mxu0 %v127
    %259 = vmatprep.subr.mxu0 0.0
    %260 = vmatpush1.msra.mxu0 %v132
    %261 = vmatprep.subr.mxu0 0.0
    %262 = vmatpush1.msra.mxu0 0.0
    %263 = vmatprep.subr.mxu0 0.0
    %264 = vmatpush1.msra.mxu0 0.0
    %265 = vmatprep.subr.mxu0 0.0
    %266 = vmatpush1.msra.mxu0 0.0
    %267 = vmatprep.subr.mxu0 0.0
    %268 = vmatpush1.msra.mxu0 0.0
    %269 = vmatprep.subr.mxu0 0.0
    %270 = vmatpush1.msra.mxu0 0.0
    %271 = vmatprep.subr.mxu0 0.0
    %272 = vmatpush1.msra.mxu0 0.0
    %273 = vmatprep.subr.mxu0 0.0
    %274 = vmatpush1.msra.mxu0 0.0
    %275 = vmatprep.subr.mxu0 0.0
    %276 = vmatpush1.msra.mxu0 0.0
    %277 = vmatprep.subr.mxu0 0.0
    %278 = vmatpush1.msra.mxu0 0.0
    %279 = vmatprep.subr.mxu0 0.0
    %280 = vmatpush1.msra.mxu0 0.0
    %281 = vmatprep.subr.mxu0 0.0
    %282 = vmatpush1.msra.mxu0 0.0
    %283 = vmatprep.subr.mxu0 0.0
    %284 = vmatpush1.msra.mxu0 0.0
    %285 = vmatprep.subr.mxu0 0.0
    %286 = vmatpush1.msra.mxu0 0.0
    %287 = vmatprep.subr.mxu0 0.0
    %288 = vmatpush1.msra.mxu0 0.0
    %289 = vmatprep.subr.mxu0 0.0
    %290 = vmatpush1.msra.mxu0 0.0
    %291 = vmatprep.subr.mxu0 0.0
    %292 = vmatpush1.msra.mxu0 0.0
    %293 = vmatprep.subr.mxu0 0.0
    %294 = vmatpush1.msra.mxu0 0.0
    %295 = vmatprep.subr.mxu0 0.0
    %296 = vmatpush1.msra.mxu0 0.0
    %297 = vmatprep.subr.mxu0 0.0
    %298 = vmatpush1.msra.mxu0 0.0
    %299 = vmatprep.subr.mxu0 0.0
    %300 = vmatpush1.msra.mxu0 0.0
    %301 = vmatprep.subr.mxu0 0.0
    %302 = vmatpush1.msra.mxu0 0.0
    %303 = vmatprep.subr.mxu0 0.0
    %304 = vmatpush1.msra.mxu0 0.0
    %305 = vmatprep.subr.mxu0 0.0
    %306 = vmatpush1.msra.mxu0 0.0
    %307 = vmatprep.subr.mxu0 0.0
    %308 = vmatpush1.msra.mxu0 0.0
    %309 = vmatprep.subr.mxu0 0.0
    %310 = vmatpush1.msra.mxu0 0.0
    %311 = vmatprep.subr.mxu0 0.0
    %312 = vmatpush1.msra.mxu0 0.0
    %313 = vmatprep.subr.mxu0 0.0
    %314 = vmatpush1.msra.mxu0 0.0
    %315 = vmatprep.subr.mxu0 0.0
    %316 = vmatpush1.msra.mxu0 0.0
    %317 = vmatprep.subr.mxu0 0.0
    %318 = vmatpush1.msra.mxu0 0.0
    %319 = vmatprep.subr.mxu0 0.0
    %320 = vmatpush1.msra.mxu0 0.0
    %321 = vmatprep.mubr.f32.mxu0 0.0
    %322 = vmatmul.mubr.f32.gmra.mrb[0].mxu0 %v252
    %v323 = vpop.f32.mrb[0].mxu0
    %v324 = vadd.f32 0.0, %v323
    %v325 = vpop.f32.mrb[0].mxu0
    %326 = vmatprep.mubr.f32.mxu0 0.0
    %327 = vmatmul.mubr.f32.gmra.mrb[0].mxu0 %v255
    %v328 = vpop.f32.mrb[0].mxu0
    %v329 = vadd.f32 0.0, %v328
    %v330 = vpop.f32.mrb[0].mxu0
    %331 = vdwg.mxu0
    %v332 = vadd.f32 %v127, %v324
    %v333 = vadd.f32 %v132, %v329
    %v334 = vsel %vm145, %v332, 0.0
    %335 = vadd.xlane.f32.xlu0 %v334
    %v336 = vpop.xlane.xlu0 %335
    %v337 = vsel %vm145, %v333, 0.0
    %338 = vadd.xlane.f32.xlu0 %v337
    %v339 = vpop.xlane.xlu0 %338
    %v340 = vrcp.pop 32.0
    %v341 = vmul.f32 %v336, %v340
    %v342 = vmul.f32 %v339, %v340
    %v343 = vsub.f32 %v332, %v341
    %v344 = vsub.f32 %v333, %v342
    %v345 = vmul.f32 %v343, %v343
    %v346 = vmul.f32 %v344, %v344
    %v347 = vsel %vm145, %v345, 0.0
    %348 = vadd.xlane.f32.xlu0 %v347
    %v349 = vpop.xlane.xlu0 %348
    %v350 = vsel %vm145, %v346, 0.0
    %351 = vadd.xlane.f32.xlu0 %v350
    %v352 = vpop.xlane.xlu0 %351
    %v353 = vmul.f32 %v349, %v340
    %v354 = vmul.f32 %v352, %v340
    %v355 = vadd.f32 %v353, 1e-05
    %v356 = vadd.f32 %v354, 1e-05
    %v357 = vrsqrt.pop %v355
    %v358 = vrsqrt.pop %v356
    %v359 = vmul.f32 %v343, %v357
    %v360 = vmul.f32 %v344, %v358
    %v361 = vlaneseq
    %v362 = vshrl.u32 %v361, 7
    %v363 = vsub.s32 0, %v362
    %v364 = vrot.slane %v40, %v363
    %v365 = vmul.f32 %v359, %v364
    %v366 = vmul.f32 %v360, %v364
    %368 = vrot.lane.b32.xlu0 %v364, 96
    %v369 = vpop.permute.xlu0 %368
    %v371 = vadd.f32 %v365, %v369
    %v372 = vadd.f32 %v366, %v369
    %v373 = vld [vmem:[#allocation5] sm:$0xff]
    %v374 = vld [vmem:[#allocation5 + $0x8] sm:$0xff]
    %v375 = vld [vmem:[#allocation5 + $0x10] sm:$0xff]
    %v376 = vld [vmem:[#allocation5 + $0x18] sm:$0xff]
    %v377 = vld [vmem:[#allocation5 + $0x60] sm:$0xff]
    %v378 = vld [vmem:[#allocation5 + $0x68] sm:$0xff]
    %v379 = vld [vmem:[#allocation5 + $0x70] sm:$0xff]
    %v380 = vld [vmem:[#allocation5 + $0x78] sm:$0xff]
    %v381 = vlaneseq
    %v382 = vshrl.u32 %v381, 7
    %v383 = vsub.s32 3, %v382
    %v384 = vrot.slane %v40, %v383
    %v386 = vsel %vm145, %v371, 0
    %v389 = vsel %vm145, %v372, 0
    %391 = vmatprep.subr.mxu0 0.0
    %392 = vmatpush1.msra.mxu0 %v373
    %393 = vmatprep.subr.mxu0 0.0
    %394 = vmatpush1.msra.mxu0 %v374
    %395 = vmatprep.subr.mxu0 0.0
    %396 = vmatpush1.msra.mxu0 %v375
    %397 = vmatprep.subr.mxu0 0.0
    %398 = vmatpush1.msra.mxu0 %v376
    %399 = vmatprep.subr.mxu0 0.0
    %400 = vmatpush1.msra.mxu0 0.0
    %401 = vmatprep.subr.mxu0 0.0
    %402 = vmatpush1.msra.mxu0 0.0
    %403 = vmatprep.subr.mxu0 0.0
    %404 = vmatpush1.msra.mxu0 0.0
    %405 = vmatprep.subr.mxu0 0.0
    %406 = vmatpush1.msra.mxu0 0.0
    %407 = vmatprep.subr.mxu0 0.0
    %408 = vmatpush1.msra.mxu0 0.0
    %409 = vmatprep.subr.mxu0 0.0
    %410 = vmatpush1.msra.mxu0 0.0
    %411 = vmatprep.subr.mxu0 0.0
    %412 = vmatpush1.msra.mxu0 0.0
    %413 = vmatprep.subr.mxu0 0.0
    %414 = vmatpush1.msra.mxu0 0.0
    %415 = vmatprep.subr.mxu0 0.0
    %416 = vmatpush1.msra.mxu0 0.0
    %417 = vmatprep.subr.mxu0 0.0
    %418 = vmatpush1.msra.mxu0 0.0
    %419 = vmatprep.subr.mxu0 0.0
    %420 = vmatpush1.msra.mxu0 0.0
    %421 = vmatprep.subr.mxu0 0.0
    %422 = vmatpush1.msra.mxu0 0.0
    %423 = vmatprep.subr.mxu0 0.0
    %424 = vmatpush1.msra.mxu0 0.0
    %425 = vmatprep.subr.mxu0 0.0
    %426 = vmatpush1.msra.mxu0 0.0
    %427 = vmatprep.subr.mxu0 0.0
    %428 = vmatpush1.msra.mxu0 0.0
    %429 = vmatprep.subr.mxu0 0.0
    %430 = vmatpush1.msra.mxu0 0.0
    %431 = vmatprep.subr.mxu0 0.0
    %432 = vmatpush1.msra.mxu0 0.0
    %433 = vmatprep.subr.mxu0 0.0
    %434 = vmatpush1.msra.mxu0 0.0
    %435 = vmatprep.subr.mxu0 0.0
    %436 = vmatpush1.msra.mxu0 0.0
    %437 = vmatprep.subr.mxu0 0.0
    %438 = vmatpush1.msra.mxu0 0.0
    %439 = vmatprep.subr.mxu0 0.0
    %440 = vmatpush1.msra.mxu0 0.0
    %441 = vmatprep.subr.mxu0 0.0
    %442 = vmatpush1.msra.mxu0 0.0
    %443 = vmatprep.subr.mxu0 0.0
    %444 = vmatpush1.msra.mxu0 0.0
    %445 = vmatprep.subr.mxu0 0.0
    %446 = vmatpush1.msra.mxu0 0.0
    %447 = vmatprep.subr.mxu0 0.0
    %448 = vmatpush1.msra.mxu0 0.0
    %449 = vmatprep.subr.mxu0 0.0
    %450 = vmatpush1.msra.mxu0 0.0
    %451 = vmatprep.subr.mxu0 0.0
    %452 = vmatpush1.msra.mxu0 0.0
    %453 = vmatprep.subr.mxu0 0.0
    %454 = vmatpush1.msra.mxu0 0.0
    %455 = vmatprep.mubr.f32.mxu0 0.0
    %456 = vmatmul.mubr.f32.gmra.mrb[0].mxu0 %v386
    %v457 = vpop.f32.mrb[0].mxu0
    %v458 = vadd.f32 %v384, %v457
    %v459 = vpop.f32.mrb[0].mxu0
    %460 = vmatprep.mubr.f32.mxu0 0.0
    %461 = vmatmul.mubr.f32.gmra.mrb[0].mxu0 %v389
    %v462 = vpop.f32.mrb[0].mxu0
    %v463 = vadd.f32 %v384, %v462
    %v464 = vpop.f32.mrb[0].mxu0
    %465 = vdwg.mxu0
    %v466 = vmul.f32 %v458, 0.5
    %v467 = vmul.f32 %v463, 0.5
    %v468 = vmul.f32 %v458, 0.70710677
    %v469 = vmul.f32 %v463, 0.70710677
    %v470 = verf.f32.pop %v468
    %v471 = verf.f32.pop %v469
    %v472 = vadd.f32 %v470, 1.0
    %v473 = vadd.f32 %v471, 1.0
    %v474 = vmul.f32 %v466, %v472
    %v475 = vmul.f32 %v467, %v473
    %476 = vmatprep.subr.mxu0 0.0
    %477 = vmatpush1.xpose.msra.mxu0 %v377
    %478 = vmatprep.subr.mxu0 0.0
    %479 = vmatpush1.xpose.msra.mxu0 %v378
    %480 = vmatprep.subr.mxu0 0.0
    %481 = vmatpush1.xpose.msra.mxu0 %v379
    %482 = vmatprep.subr.mxu0 0.0
    %483 = vmatpush1.xpose.msra.mxu0 %v380
    %484 = vmatprep.subr.mxu0 0.0
    %485 = vmatpush1.xpose.msra.mxu0 0.0
    %486 = vmatprep.subr.mxu0 0.0
    %487 = vmatpush1.xpose.msra.mxu0 0.0
    %488 = vmatprep.subr.mxu0 0.0
    %489 = vmatpush1.xpose.msra.mxu0 0.0
    %490 = vmatprep.subr.mxu0 0.0
    %491 = vmatpush1.xpose.msra.mxu0 0.0
    %492 = vmatprep.subr.mxu0 0.0
    %493 = vmatpush1.xpose.msra.mxu0 0.0
    %494 = vmatprep.subr.mxu0 0.0
    %495 = vmatpush1.xpose.msra.mxu0 0.0
    %496 = vmatprep.subr.mxu0 0.0
    %497 = vmatpush1.xpose.msra.mxu0 0.0
    %498 = vmatprep.subr.mxu0 0.0
    %499 = vmatpush1.xpose.msra.mxu0 0.0
    %500 = vmatprep.subr.mxu0 0.0
    %501 = vmatpush1.xpose.msra.mxu0 0.0
    %502 = vmatprep.subr.mxu0 0.0
    %503 = vmatpush1.xpose.msra.mxu0 0.0
    %504 = vmatprep.subr.mxu0 0.0
    %505 = vmatpush1.xpose.msra.mxu0 0.0
    %506 = vmatprep.subr.mxu0 0.0
    %507 = vmatpush1.xpose.msra.mxu0 0.0
    %508 = vmatprep.subr.mxu0 0.0
    %509 = vmatpush1.xpose.msra.mxu0 0.0
    %510 = vmatprep.subr.mxu0 0.0
    %511 = vmatpush1.xpose.msra.mxu0 0.0
    %512 = vmatprep.subr.mxu0 0.0
    %513 = vmatpush1.xpose.msra.mxu0 0.0
    %514 = vmatprep.subr.mxu0 0.0
    %515 = vmatpush1.xpose.msra.mxu0 0.0
    %516 = vmatprep.subr.mxu0 0.0
    %517 = vmatpush1.xpose.msra.mxu0 0.0
    %518 = vmatprep.subr.mxu0 0.0
    %519 = vmatpush1.xpose.msra.mxu0 0.0
    %520 = vmatprep.subr.mxu0 0.0
    %521 = vmatpush1.xpose.msra.mxu0 0.0
    %522 = vmatprep.subr.mxu0 0.0
    %523 = vmatpush1.xpose.msra.mxu0 0.0
    %524 = vmatprep.subr.mxu0 0.0
    %525 = vmatpush1.xpose.msra.mxu0 0.0
    %526 = vmatprep.subr.mxu0 0.0
    %527 = vmatpush1.xpose.msra.mxu0 0.0
    %528 = vmatprep.subr.mxu0 0.0
    %529 = vmatpush1.xpose.msra.mxu0 0.0
    %530 = vmatprep.subr.mxu0 0.0
    %531 = vmatpush1.xpose.msra.mxu0 0.0
    %532 = vmatprep.subr.mxu0 0.0
    %533 = vmatpush1.xpose.msra.mxu0 0.0
    %534 = vmatprep.subr.mxu0 0.0
    %535 = vmatpush1.xpose.msra.mxu0 0.0
    %536 = vmatprep.subr.mxu0 0.0
    %537 = vmatpush1.xpose.msra.mxu0 0.0
    %538 = vmatprep.subr.mxu0 0.0
    %539 = vmatpush1.xpose.msra.mxu0 0.0
    %540 = vmatprep.mubr.f32.mxu0 0.0
    %541 = vmatmul.mubr.f32.gmra.mrb[0].mxu0 %v474
    %v542 = vpop.f32.mrb[0].mxu0
    %v543 = vadd.f32 %v48, %v542
    %v544 = vpop.f32.mrb[0].mxu0
    %545 = vmatprep.mubr.f32.mxu0 0.0
    %546 = vmatmul.mubr.f32.gmra.mrb[0].mxu0 %v475
    %v547 = vpop.f32.mrb[0].mxu0
    %v548 = vadd.f32 %v48, %v547
    %v549 = vpop.f32.mrb[0].mxu0
    %550 = vdwg.mxu0
    %v551 = vadd.f32 %v371, %v543
    %v552 = vadd.f32 %v372, %v548
    %v553 = vsel %vm145, %v551, 0.0
    %554 = vadd.xlane.f32.xlu0 %v553
    %v555 = vpop.xlane.xlu0 %554
    %v556 = vsel %vm145, %v552, 0.0
    %557 = vadd.xlane.f32.xlu0 %v556
    %v558 = vpop.xlane.xlu0 %557
    %v559 = vmul.f32 %v555, %v340
    %v560 = vmul.f32 %v558, %v340
    %v561 = vsub.f32 %v551, %v559
    %v562 = vsub.f32 %v552, %v560
    %v563 = vmul.f32 %v561, %v561
    %v564 = vmul.f32 %v562, %v562
    %v565 = vsel %vm145, %v563, 0.0
    %566 = vadd.xlane.f32.xlu0 %v565
    %v567 = vpop.xlane.xlu0 %566
    %v568 = vsel %vm145, %v564, 0.0
    %569 = vadd.xlane.f32.xlu0 %v568
    %v570 = vpop.xlane.xlu0 %569
    %v571 = vmul.f32 %v567, %v340
    %v572 = vmul.f32 %v570, %v340
    %v573 = vadd.f32 %v571, 1e-05
    %v574 = vadd.f32 %v572, 1e-05
    %v575 = vrsqrt.pop %v573
    %v576 = vrsqrt.pop %v574
    %v577 = vmul.f32 %v561, %v575
    %v578 = vmul.f32 %v562, %v576
    %579 = vrot.lane.b32.xlu0 %v364, 64
    %v580 = vpop.permute.xlu0 %579
    %v582 = vmul.f32 %v577, %v580
    %v583 = vmul.f32 %v578, %v580
    %584 = vrot.lane.b32.xlu0 %v364, 32
    %v585 = vpop.permute.xlu0 %584
    %v587 = vadd.f32 %v582, %v585
    %v588 = vadd.f32 %v583, %v585
    %v590 = vsel %vm145, %v587, 0
    %v593 = vsel %vm145, %v588, 0
    %595 = vmatprep.subr.mxu0 0.0
    %596 = vmatpush1.xpose.msra.mxu0 %v590
    %597 = vmatprep.subr.mxu0 0.0
    %598 = vmatpush1.xpose.msra.mxu0 %v593
    %599 = vmatprep.subr.mxu0 0.0
    %600 = vmatpush1.xpose.msra.mxu0 0.0
    %601 = vmatprep.subr.mxu0 0.0
    %602 = vmatpush1.xpose.msra.mxu0 0.0
    %603 = vmatprep.subr.mxu0 0.0
    %604 = vmatpush1.xpose.msra.mxu0 0.0
    %605 = vmatprep.subr.mxu0 0.0
    %606 = vmatpush1.xpose.msra.mxu0 0.0
    %607 = vmatprep.subr.mxu0 0.0
    %608 = vmatpush1.xpose.msra.mxu0 0.0
    %609 = vmatprep.subr.mxu0 0.0
    %610 = vmatpush1.xpose.msra.mxu0 0.0
    %611 = vmatprep.subr.mxu0 0.0
    %612 = vmatpush1.xpose.msra.mxu0 0.0
    %613 = vmatprep.subr.mxu0 0.0
    %614 = vmatpush1.xpose.msra.mxu0 0.0
    %615 = vmatprep.subr.mxu0 0.0
    %616 = vmatpush1.xpose.msra.mxu0 0.0
    %617 = vmatprep.subr.mxu0 0.0
    %618 = vmatpush1.xpose.msra.mxu0 0.0
    %619 = vmatprep.subr.mxu0 0.0
    %620 = vmatpush1.xpose.msra.mxu0 0.0
    %621 = vmatprep.subr.mxu0 0.0
    %622 = vmatpush1.xpose.msra.mxu0 0.0
    %623 = vmatprep.subr.mxu0 0.0
    %624 = vmatpush1.xpose.msra.mxu0 0.0
    %625 = vmatprep.subr.mxu0 0.0
    %626 = vmatpush1.xpose.msra.mxu0 0.0
    %627 = vmatprep.subr.mxu0 0.0
    %628 = vmatpush1.xpose.msra.mxu0 0.0
    %629 = vmatprep.subr.mxu0 0.0
    %630 = vmatpush1.xpose.msra.mxu0 0.0
    %631 = vmatprep.subr.mxu0 0.0
    %632 = vmatpush1.xpose.msra.mxu0 0.0
    %633 = vmatprep.subr.mxu0 0.0
    %634 = vmatpush1.xpose.msra.mxu0 0.0
    %635 = vmatprep.subr.mxu0 0.0
    %636 = vmatpush1.xpose.msra.mxu0 0.0
    %637 = vmatprep.subr.mxu0 0.0
    %638 = vmatpush1.xpose.msra.mxu0 0.0
    %639 = vmatprep.subr.mxu0 0.0
    %640 = vmatpush1.xpose.msra.mxu0 0.0
    %641 = vmatprep.subr.mxu0 0.0
    %642 = vmatpush1.xpose.msra.mxu0 0.0
    %643 = vmatprep.subr.mxu0 0.0
    %644 = vmatpush1.xpose.msra.mxu0 0.0
    %645 = vmatprep.subr.mxu0 0.0
    %646 = vmatpush1.xpose.msra.mxu0 0.0
    %647 = vmatprep.subr.mxu0 0.0
    %648 = vmatpush1.xpose.msra.mxu0 0.0
    %649 = vmatprep.subr.mxu0 0.0
    %650 = vmatpush1.xpose.msra.mxu0 0.0
    %651 = vmatprep.subr.mxu0 0.0
    %652 = vmatpush1.xpose.msra.mxu0 0.0
    %653 = vmatprep.subr.mxu0 0.0
    %654 = vmatpush1.xpose.msra.mxu0 0.0
    %655 = vmatprep.subr.mxu0 0.0
    %656 = vmatpush1.xpose.msra.mxu0 0.0
    %657 = vmatprep.subr.mxu0 0.0
    %658 = vmatpush1.xpose.msra.mxu0 0.0
    %659 = vmatprep.mubr.f32.mxu0 0.0
    %660 = vmatmul.mubr.f32.gmra.mrb[0].mxu0 %v590
    %v661 = vpop.f32.mrb[0].mxu0
    %v662 = vadd.f32 0.0, %v661
    %v663 = vpop.f32.mrb[0].mxu0
    %664 = vmatprep.mubr.f32.mxu0 0.0
    %665 = vmatmul.mubr.f32.gmra.mrb[0].mxu0 %v593
    %v666 = vpop.f32.mrb[0].mxu0
    %v667 = vadd.f32 0.0, %v666
    %v668 = vpop.f32.mrb[0].mxu0
    %669 = vdwg.mxu0
    %v670 = vsel %vm143, %v662, -1e+30
    %v671 = vsel %vm144, %v667, -1e+30
    %v672 = vsel %vm53, %v670, -inf
    %673 = vmax.xlane.f32.xlu0 %v672
    %v674 = vpop.xlane.xlu0 %673
    %v675 = vsel %vm53, %v671, -inf
    %676 = vmax.xlane.f32.xlu0 %v675
    %v677 = vpop.xlane.xlu0 %676
    %v678 = vsub.f32 %v670, %v674
    %v679 = vsub.f32 %v671, %v677
    %v680 = vmul.f32 %v678, 1.442695
    %v681 = vpow.pop %v680
    %v682 = vmul.f32 %v679, 1.442695
    %v683 = vpow.pop %v682
    %v684 = vsel %vm53, %v681, 0.0
    %685 = vadd.xlane.f32.xlu0 %v684
    %v686 = vpop.xlane.xlu0 %685
    %v687 = vsel %vm53, %v683, 0.0
    %688 = vadd.xlane.f32.xlu0 %v687
    %v689 = vpop.xlane.xlu0 %688
    %v690 = vrcp.pop %v686
    %v691 = vmul.f32 %v681, %v690
    %v692 = vrcp.pop %v689
    %v693 = vmul.f32 %v683, %v692
    %v695 = vsel %vm53, %v691, 0
    %v698 = vsel %vm53, %v693, 0
    %700 = vmatprep.subr.mxu0 0.0
    %701 = vmatpush1.msra.mxu0 %v587
    %702 = vmatprep.subr.mxu0 0.0
    %703 = vmatpush1.msra.mxu0 %v588
    %704 = vmatprep.subr.mxu0 0.0
    %705 = vmatpush1.msra.mxu0 0.0
    %706 = vmatprep.subr.mxu0 0.0
    %707 = vmatpush1.msra.mxu0 0.0
    %708 = vmatprep.subr.mxu0 0.0
    %709 = vmatpush1.msra.mxu0 0.0
    %710 = vmatprep.subr.mxu0 0.0
    %711 = vmatpush1.msra.mxu0 0.0
    %712 = vmatprep.subr.mxu0 0.0
    %713 = vmatpush1.msra.mxu0 0.0
    %714 = vmatprep.subr.mxu0 0.0
    %715 = vmatpush1.msra.mxu0 0.0
    %716 = vmatprep.subr.mxu0 0.0
    %717 = vmatpush1.msra.mxu0 0.0
    %718 = vmatprep.subr.mxu0 0.0
    %719 = vmatpush1.msra.mxu0 0.0
    %720 = vmatprep.subr.mxu0 0.0
    %721 = vmatpush1.msra.mxu0 0.0
    %722 = vmatprep.subr.mxu0 0.0
    %723 = vmatpush1.msra.mxu0 0.0
    %724 = vmatprep.subr.mxu0 0.0
    %725 = vmatpush1.msra.mxu0 0.0
    %726 = vmatprep.subr.mxu0 0.0
    %727 = vmatpush1.msra.mxu0 0.0
    %728 = vmatprep.subr.mxu0 0.0
    %729 = vmatpush1.msra.mxu0 0.0
    %730 = vmatprep.subr.mxu0 0.0
    %731 = vmatpush1.msra.mxu0 0.0
    %732 = vmatprep.subr.mxu0 0.0
    %733 = vmatpush1.msra.mxu0 0.0
    %734 = vmatprep.subr.mxu0 0.0
    %735 = vmatpush1.msra.mxu0 0.0
    %736 = vmatprep.subr.mxu0 0.0
    %737 = vmatpush1.msra.mxu0 0.0
    %738 = vmatprep.subr.mxu0 0.0
    %739 = vmatpush1.msra.mxu0 0.0
    %740 = vmatprep.subr.mxu0 0.0
    %741 = vmatpush1.msra.mxu0 0.0
    %742 = vmatprep.subr.mxu0 0.0
    %743 = vmatpush1.msra.mxu0 0.0
    %744 = vmatprep.subr.mxu0 0.0
    %745 = vmatpush1.msra.mxu0 0.0
    %746 = vmatprep.subr.mxu0 0.0
    %747 = vmatpush1.msra.mxu0 0.0
    %748 = vmatprep.subr.mxu0 0.0
    %749 = vmatpush1.msra.mxu0 0.0
    %750 = vmatprep.subr.mxu0 0.0
    %751 = vmatpush1.msra.mxu0 0.0
    %752 = vmatprep.subr.mxu0 0.0
    %753 = vmatpush1.msra.mxu0 0.0
    %754 = vmatprep.subr.mxu0 0.0
    %755 = vmatpush1.msra.mxu0 0.0
    %756 = vmatprep.subr.mxu0 0.0
    %757 = vmatpush1.msra.mxu0 0.0
    %758 = vmatprep.subr.mxu0 0.0
    %759 = vmatpush1.msra.mxu0 0.0
    %760 = vmatprep.subr.mxu0 0.0
    %761 = vmatpush1.msra.mxu0 0.0
    %762 = vmatprep.subr.mxu0 0.0
    %763 = vmatpush1.msra.mxu0 0.0
    %764 = vmatprep.mubr.f32.mxu0 0.0
    %765 = vmatmul.mubr.f32.gmra.mrb[0].mxu0 %v695
    %v766 = vpop.f32.mrb[0].mxu0
    %v767 = vadd.f32 0.0, %v766
    %v768 = vpop.f32.mrb[0].mxu0
    %769 = vmatprep.mubr.f32.mxu0 0.0
    %770 = vmatmul.mubr.f32.gmra.mrb[0].mxu0 %v698
    %v771 = vpop.f32.mrb[0].mxu0
    %v772 = vadd.f32 0.0, %v771
    %v773 = vpop.f32.mrb[0].mxu0
    %774 = vdwg.mxu0
    %v775 = vadd.f32 %v587, %v767
    %v776 = vadd.f32 %v588, %v772
    %v777 = vsel %vm145, %v775, 0.0
    %778 = vadd.xlane.f32.xlu0 %v777
    %v779 = vpop.xlane.xlu0 %778
    %v780 = vsel %vm145, %v776, 0.0
    %781 = vadd.xlane.f32.xlu0 %v780
    %v782 = vpop.xlane.xlu0 %781
    %v783 = vmul.f32 %v779, %v340
    %v784 = vmul.f32 %v782, %v340
    %v785 = vsub.f32 %v775, %v783
    %v786 = vsub.f32 %v776, %v784
    %v787 = vmul.f32 %v785, %v785
    %v788 = vmul.f32 %v786, %v786
    %v789 = vsel %vm145, %v787, 0.0
    %790 = vadd.xlane.f32.xlu0 %v789
    %v791 = vpop.xlane.xlu0 %790
    %v792 = vsel %vm145, %v788, 0.0
    %793 = vadd.xlane.f32.xlu0 %v792
    %v794 = vpop.xlane.xlu0 %793
    %v795 = vmul.f32 %v791, %v340
    %v796 = vmul.f32 %v794, %v340
    %v797 = vadd.f32 %v795, 1e-05
    %v798 = vadd.f32 %v796, 1e-05
    %v799 = vrsqrt.pop %v797
    %v800 = vrsqrt.pop %v798
    %v801 = vmul.f32 %v785, %v799
    %v802 = vmul.f32 %v786, %v800
    %v803 = vlaneseq
    %v804 = vshrl.u32 %v803, 7
    %v805 = vsub.s32 1, %v804
    %v806 = vrot.slane %v40, %v805
    %v807 = vmul.f32 %v801, %v806
    %v808 = vmul.f32 %v802, %v806
    %810 = vrot.lane.b32.xlu0 %v806, 96
    %v811 = vpop.permute.xlu0 %810
    %v813 = vadd.f32 %v807, %v811
    %v814 = vadd.f32 %v808, %v811
    %v815 = vld [vmem:[#allocation5 + $0x20] sm:$0xff]
    %v816 = vld [vmem:[#allocation5 + $0x28] sm:$0xff]
    %v817 = vld [vmem:[#allocation5 + $0x30] sm:$0xff]
    %v818 = vld [vmem:[#allocation5 + $0x38] sm:$0xff]
    %v819 = vld [vmem:[#allocation5 + $0x80] sm:$0xff]
    %v820 = vld [vmem:[#allocation5 + $0x88] sm:$0xff]
    %v821 = vld [vmem:[#allocation5 + $0x90] sm:$0xff]
    %v822 = vld [vmem:[#allocation5 + $0x98] sm:$0xff]
    %v823 = vlaneseq
    %v824 = vshrl.u32 %v823, 7
    %v825 = vsub.s32 4, %v824
    %v826 = vrot.slane %v40, %v825
    %v828 = vsel %vm145, %v813, 0
    %v831 = vsel %vm145, %v814, 0
    %833 = vmatprep.subr.mxu0 0.0
    %834 = vmatpush1.msra.mxu0 %v815
    %835 = vmatprep.subr.mxu0 0.0
    %836 = vmatpush1.msra.mxu0 %v816
    %837 = vmatprep.subr.mxu0 0.0
    %838 = vmatpush1.msra.mxu0 %v817
    %839 = vmatprep.subr.mxu0 0.0
    %840 = vmatpush1.msra.mxu0 %v818
    %841 = vmatprep.subr.mxu0 0.0
    %842 = vmatpush1.msra.mxu0 0.0
    %843 = vmatprep.subr.mxu0 0.0
    %844 = vmatpush1.msra.mxu0 0.0
    %845 = vmatprep.subr.mxu0 0.0
    %846 = vmatpush1.msra.mxu0 0.0
    %847 = vmatprep.subr.mxu0 0.0
    %848 = vmatpush1.msra.mxu0 0.0
    %849 = vmatprep.subr.mxu0 0.0
    %850 = vmatpush1.msra.mxu0 0.0
    %851 = vmatprep.subr.mxu0 0.0
    %852 = vmatpush1.msra.mxu0 0.0
    %853 = vmatprep.subr.mxu0 0.0
    %854 = vmatpush1.msra.mxu0 0.0
    %855 = vmatprep.subr.mxu0 0.0
    %856 = vmatpush1.msra.mxu0 0.0
    %857 = vmatprep.subr.mxu0 0.0
    %858 = vmatpush1.msra.mxu0 0.0
    %859 = vmatprep.subr.mxu0 0.0
    %860 = vmatpush1.msra.mxu0 0.0
    %861 = vmatprep.subr.mxu0 0.0
    %862 = vmatpush1.msra.mxu0 0.0
    %863 = vmatprep.subr.mxu0 0.0
    %864 = vmatpush1.msra.mxu0 0.0
    %865 = vmatprep.subr.mxu0 0.0
    %866 = vmatpush1.msra.mxu0 0.0
    %867 = vmatprep.subr.mxu0 0.0
    %868 = vmatpush1.msra.mxu0 0.0
    %869 = vmatprep.subr.mxu0 0.0
    %870 = vmatpush1.msra.mxu0 0.0
    %871 = vmatprep.subr.mxu0 0.0
    %872 = vmatpush1.msra.mxu0 0.0
    %873 = vmatprep.subr.mxu0 0.0
    %874 = vmatpush1.msra.mxu0 0.0
    %875 = vmatprep.subr.mxu0 0.0
    %876 = vmatpush1.msra.mxu0 0.0
    %877 = vmatprep.subr.mxu0 0.0
    %878 = vmatpush1.msra.mxu0 0.0
    %879 = vmatprep.subr.mxu0 0.0
    %880 = vmatpush1.msra.mxu0 0.0
    %881 = vmatprep.subr.mxu0 0.0
    %882 = vmatpush1.msra.mxu0 0.0
    %883 = vmatprep.subr.mxu0 0.0
    %884 = vmatpush1.msra.mxu0 0.0
    %885 = vmatprep.subr.mxu0 0.0
    %886 = vmatpush1.msra.mxu0 0.0
    %887 = vmatprep.subr.mxu0 0.0
    %888 = vmatpush1.msra.mxu0 0.0
    %889 = vmatprep.subr.mxu0 0.0
    %890 = vmatpush1.msra.mxu0 0.0
    %891 = vmatprep.subr.mxu0 0.0
    %892 = vmatpush1.msra.mxu0 0.0
    %893 = vmatprep.subr.mxu0 0.0
    %894 = vmatpush1.msra.mxu0 0.0
    %895 = vmatprep.subr.mxu0 0.0
    %896 = vmatpush1.msra.mxu0 0.0
    %897 = vmatprep.mubr.f32.mxu0 0.0
    %898 = vmatmul.mubr.f32.gmra.mrb[0].mxu0 %v828
    %v899 = vpop.f32.mrb[0].mxu0
    %v900 = vadd.f32 %v826, %v899
    %v901 = vpop.f32.mrb[0].mxu0
    %902 = vmatprep.mubr.f32.mxu0 0.0
    %903 = vmatmul.mubr.f32.gmra.mrb[0].mxu0 %v831
    %v904 = vpop.f32.mrb[0].mxu0
    %v905 = vadd.f32 %v826, %v904
    %v906 = vpop.f32.mrb[0].mxu0
    %907 = vdwg.mxu0
    %v908 = vmul.f32 %v900, 0.5
    %v909 = vmul.f32 %v905, 0.5
    %v910 = vmul.f32 %v900, 0.70710677
    %v911 = vmul.f32 %v905, 0.70710677
    %v912 = verf.f32.pop %v910
    %v913 = verf.f32.pop %v911
    %v914 = vadd.f32 %v912, 1.0
    %v915 = vadd.f32 %v913, 1.0
    %v916 = vmul.f32 %v908, %v914
    %v917 = vmul.f32 %v909, %v915
    %918 = vrot.lane.b32.xlu0 %v48, 96
    %v919 = vpop.permute.xlu0 %918
    %921 = vmatprep.subr.mxu0 0.0
    %922 = vmatpush1.xpose.msra.mxu0 %v819
    %923 = vmatprep.subr.mxu0 0.0
    %924 = vmatpush1.xpose.msra.mxu0 %v820
    %925 = vmatprep.subr.mxu0 0.0
    %926 = vmatpush1.xpose.msra.mxu0 %v821
    %927 = vmatprep.subr.mxu0 0.0
    %928 = vmatpush1.xpose.msra.mxu0 %v822
    %929 = vmatprep.subr.mxu0 0.0
    %930 = vmatpush1.xpose.msra.mxu0 0.0
    %931 = vmatprep.subr.mxu0 0.0
    %932 = vmatpush1.xpose.msra.mxu0 0.0
    %933 = vmatprep.subr.mxu0 0.0
    %934 = vmatpush1.xpose.msra.mxu0 0.0
    %935 = vmatprep.subr.mxu0 0.0
    %936 = vmatpush1.xpose.msra.mxu0 0.0
    %937 = vmatprep.subr.mxu0 0.0
    %938 = vmatpush1.xpose.msra.mxu0 0.0
    %939 = vmatprep.subr.mxu0 0.0
    %940 = vmatpush1.xpose.msra.mxu0 0.0
    %941 = vmatprep.subr.mxu0 0.0
    %942 = vmatpush1.xpose.msra.mxu0 0.0
    %943 = vmatprep.subr.mxu0 0.0
    %944 = vmatpush1.xpose.msra.mxu0 0.0
    %945 = vmatprep.subr.mxu0 0.0
    %946 = vmatpush1.xpose.msra.mxu0 0.0
    %947 = vmatprep.subr.mxu0 0.0
    %948 = vmatpush1.xpose.msra.mxu0 0.0
    %949 = vmatprep.subr.mxu0 0.0
    %950 = vmatpush1.xpose.msra.mxu0 0.0
    %951 = vmatprep.subr.mxu0 0.0
    %952 = vmatpush1.xpose.msra.mxu0 0.0
    %953 = vmatprep.subr.mxu0 0.0
    %954 = vmatpush1.xpose.msra.mxu0 0.0
    %955 = vmatprep.subr.mxu0 0.0
    %956 = vmatpush1.xpose.msra.mxu0 0.0
    %957 = vmatprep.subr.mxu0 0.0
    %958 = vmatpush1.xpose.msra.mxu0 0.0
    %959 = vmatprep.subr.mxu0 0.0
    %960 = vmatpush1.xpose.msra.mxu0 0.0
    %961 = vmatprep.subr.mxu0 0.0
    %962 = vmatpush1.xpose.msra.mxu0 0.0
    %963 = vmatprep.subr.mxu0 0.0
    %964 = vmatpush1.xpose.msra.mxu0 0.0
    %965 = vmatprep.subr.mxu0 0.0
    %966 = vmatpush1.xpose.msra.mxu0 0.0
    %967 = vmatprep.subr.mxu0 0.0
    %968 = vmatpush1.xpose.msra.mxu0 0.0
    %969 = vmatprep.subr.mxu0 0.0
    %970 = vmatpush1.xpose.msra.mxu0 0.0
    %971 = vmatprep.subr.mxu0 0.0
    %972 = vmatpush1.xpose.msra.mxu0 0.0
    %973 = vmatprep.subr.mxu0 0.0
    %974 = vmatpush1.xpose.msra.mxu0 0.0
    %975 = vmatprep.subr.mxu0 0.0
    %976 = vmatpush1.xpose.msra.mxu0 0.0
    %977 = vmatprep.subr.mxu0 0.0
    %978 = vmatpush1.xpose.msra.mxu0 0.0
    %979 = vmatprep.subr.mxu0 0.0
    %980 = vmatpush1.xpose.msra.mxu0 0.0
    %981 = vmatprep.subr.mxu0 0.0
    %982 = vmatpush1.xpose.msra.mxu0 0.0
    %983 = vmatprep.subr.mxu0 0.0
    %984 = vmatpush1.xpose.msra.mxu0 0.0
    %985 = vmatprep.mubr.f32.mxu0 0.0
    %986 = vmatmul.mubr.f32.gmra.mrb[0].mxu0 %v916
    %v987 = vpop.f32.mrb[0].mxu0
    %v988 = vadd.f32 %v919, %v987
    %v989 = vpop.f32.mrb[0].mxu0
    %990 = vmatprep.mubr.f32.mxu0 0.0
    %991 = vmatmul.mubr.f32.gmra.mrb[0].mxu0 %v917
    %v992 = vpop.f32.mrb[0].mxu0
    %v993 = vadd.f32 %v919, %v992
    %v994 = vpop.f32.mrb[0].mxu0
    %995 = vdwg.mxu0
    %v996 = vadd.f32 %v813, %v988
    %v997 = vadd.f32 %v814, %v993
    %v998 = vsel %vm145, %v996, 0.0
    %999 = vadd.xlane.f32.xlu0 %v998
    %v1000 = vpop.xlane.xlu0 %999
    %v1001 = vsel %vm145, %v997, 0.0
    %1002 = vadd.xlane.f32.xlu0 %v1001
    %v1003 = vpop.xlane.xlu0 %1002
    %v1004 = vmul.f32 %v1000, %v340
    %v1005 = vmul.f32 %v1003, %v340
    %v1006 = vsub.f32 %v996, %v1004
    %v1007 = vsub.f32 %v997, %v1005
    %v1008 = vmul.f32 %v1006, %v1006
    %v1009 = vmul.f32 %v1007, %v1007
    %v1010 = vsel %vm145, %v1008, 0.0
    %1011 = vadd.xlane.f32.xlu0 %v1010
    %v1012 = vpop.xlane.xlu0 %1011
    %v1013 = vsel %vm145, %v1009, 0.0
    %1014 = vadd.xlane.f32.xlu0 %v1013
    %v1015 = vpop.xlane.xlu0 %1014
    %v1016 = vmul.f32 %v1012, %v340
    %v1017 = vmul.f32 %v1015, %v340
    %v1018 = vadd.f32 %v1016, 1e-05
    %v1019 = vadd.f32 %v1017, 1e-05
    %v1020 = vrsqrt.pop %v1018
    %v1021 = vrsqrt.pop %v1019
    %v1022 = vmul.f32 %v1006, %v1020
    %v1023 = vmul.f32 %v1007, %v1021
    %1024 = vrot.lane.b32.xlu0 %v806, 64
    %v1025 = vpop.permute.xlu0 %1024
    %v1027 = vmul.f32 %v1022, %v1025
    %v1028 = vmul.f32 %v1023, %v1025
    %1029 = vrot.lane.b32.xlu0 %v806, 32
    %v1030 = vpop.permute.xlu0 %1029
    %v1032 = vadd.f32 %v1027, %v1030
    %v1033 = vadd.f32 %v1028, %v1030
    %v1035 = vsel %vm145, %v1032, 0
    %v1038 = vsel %vm145, %v1033, 0
    %1040 = vmatprep.subr.mxu0 0.0
    %1041 = vmatpush1.xpose.msra.mxu0 %v1035
    %1042 = vmatprep.subr.mxu0 0.0
    %1043 = vmatpush1.xpose.msra.mxu0 %v1038
    %1044 = vmatprep.subr.mxu0 0.0
    %1045 = vmatpush1.xpose.msra.mxu0 0.0
    %1046 = vmatprep.subr.mxu0 0.0
    %1047 = vmatpush1.xpose.msra.mxu0 0.0
    %1048 = vmatprep.subr.mxu0 0.0
    %1049 = vmatpush1.xpose.msra.mxu0 0.0
    %1050 = vmatprep.subr.mxu0 0.0
    %1051 = vmatpush1.xpose.msra.mxu0 0.0
    %1052 = vmatprep.subr.mxu0 0.0
    %1053 = vmatpush1.xpose.msra.mxu0 0.0
    %1054 = vmatprep.subr.mxu0 0.0
    %1055 = vmatpush1.xpose.msra.mxu0 0.0
    %1056 = vmatprep.subr.mxu0 0.0
    %1057 = vmatpush1.xpose.msra.mxu0 0.0
    %1058 = vmatprep.subr.mxu0 0.0
    %1059 = vmatpush1.xpose.msra.mxu0 0.0
    %1060 = vmatprep.subr.mxu0 0.0
    %1061 = vmatpush1.xpose.msra.mxu0 0.0
    %1062 = vmatprep.subr.mxu0 0.0
    %1063 = vmatpush1.xpose.msra.mxu0 0.0
    %1064 = vmatprep.subr.mxu0 0.0
    %1065 = vmatpush1.xpose.msra.mxu0 0.0
    %1066 = vmatprep.subr.mxu0 0.0
    %1067 = vmatpush1.xpose.msra.mxu0 0.0
    %1068 = vmatprep.subr.mxu0 0.0
    %1069 = vmatpush1.xpose.msra.mxu0 0.0
    %1070 = vmatprep.subr.mxu0 0.0
    %1071 = vmatpush1.xpose.msra.mxu0 0.0
    %1072 = vmatprep.subr.mxu0 0.0
    %1073 = vmatpush1.xpose.msra.mxu0 0.0
    %1074 = vmatprep.subr.mxu0 0.0
    %1075 = vmatpush1.xpose.msra.mxu0 0.0
    %1076 = vmatprep.subr.mxu0 0.0
    %1077 = vmatpush1.xpose.msra.mxu0 0.0
    %1078 = vmatprep.subr.mxu0 0.0
    %1079 = vmatpush1.xpose.msra.mxu0 0.0
    %1080 = vmatprep.subr.mxu0 0.0
    %1081 = vmatpush1.xpose.msra.mxu0 0.0
    %1082 = vmatprep.subr.mxu0 0.0
    %1083 = vmatpush1.xpose.msra.mxu0 0.0
    %1084 = vmatprep.subr.mxu0 0.0
    %1085 = vmatpush1.xpose.msra.mxu0 0.0
    %1086 = vmatprep.subr.mxu0 0.0
    %1087 = vmatpush1.xpose.msra.mxu0 0.0
    %1088 = vmatprep.subr.mxu0 0.0
    %1089 = vmatpush1.xpose.msra.mxu0 0.0
    %1090 = vmatprep.subr.mxu0 0.0
    %1091 = vmatpush1.xpose.msra.mxu0 0.0
    %1092 = vmatprep.subr.mxu0 0.0
    %1093 = vmatpush1.xpose.msra.mxu0 0.0
    %1094 = vmatprep.subr.mxu0 0.0
    %1095 = vmatpush1.xpose.msra.mxu0 0.0
    %1096 = vmatprep.subr.mxu0 0.0
    %1097 = vmatpush1.xpose.msra.mxu0 0.0
    %1098 = vmatprep.subr.mxu0 0.0
    %1099 = vmatpush1.xpose.msra.mxu0 0.0
    %1100 = vmatprep.subr.mxu0 0.0
    %1101 = vmatpush1.xpose.msra.mxu0 0.0
    %1102 = vmatprep.subr.mxu0 0.0
    %1103 = vmatpush1.xpose.msra.mxu0 0.0
    %1104 = vmatprep.mubr.f32.mxu0 0.0
    %1105 = vmatmul.mubr.f32.gmra.mrb[0].mxu0 %v1035
    %v1106 = vpop.f32.mrb[0].mxu0
    %v1107 = vadd.f32 0.0, %v1106
    %v1108 = vpop.f32.mrb[0].mxu0
    %1109 = vmatprep.mubr.f32.mxu0 0.0
    %1110 = vmatmul.mubr.f32.gmra.mrb[0].mxu0 %v1038
    %v1111 = vpop.f32.mrb[0].mxu0
    %v1112 = vadd.f32 0.0, %v1111
    %v1113 = vpop.f32.mrb[0].mxu0
    %1114 = vdwg.mxu0
    %v1115 = vsel %vm143, %v1107, -1e+30
    %v1116 = vsel %vm144, %v1112, -1e+30
    %v1117 = vsel %vm53, %v1115, -inf
    %1118 = vmax.xlane.f32.xlu0 %v1117
    %v1119 = vpop.xlane.xlu0 %1118
    %v1120 = vsel %vm53, %v1116, -inf
    %1121 = vmax.xlane.f32.xlu0 %v1120
    %v1122 = vpop.xlane.xlu0 %1121
    %v1123 = vsub.f32 %v1115, %v1119
    %v1124 = vsub.f32 %v1116, %v1122
    %v1125 = vmul.f32 %v1123, 1.442695
    %v1126 = vpow.pop %v1125
    %v1127 = vmul.f32 %v1124, 1.442695
    %v1128 = vpow.pop %v1127
    %v1129 = vsel %vm53, %v1126, 0.0
    %1130 = vadd.xlane.f32.xlu0 %v1129
    %v1131 = vpop.xlane.xlu0 %1130
    %v1132 = vsel %vm53, %v1128, 0.0
    %1133 = vadd.xlane.f32.xlu0 %v1132
    %v1134 = vpop.xlane.xlu0 %1133
    %v1135 = vrcp.pop %v1131
    %v1136 = vmul.f32 %v1126, %v1135
    %v1137 = vrcp.pop %v1134
    %v1138 = vmul.f32 %v1128, %v1137
    %v1140 = vsel %vm53, %v1136, 0
    %v1143 = vsel %vm53, %v1138, 0
    %1145 = vmatprep.subr.mxu0 0.0
    %1146 = vmatpush1.msra.mxu0 %v1032
    %1147 = vmatprep.subr.mxu0 0.0
    %1148 = vmatpush1.msra.mxu0 %v1033
    %1149 = vmatprep.subr.mxu0 0.0
    %1150 = vmatpush1.msra.mxu0 0.0
    %1151 = vmatprep.subr.mxu0 0.0
    %1152 = vmatpush1.msra.mxu0 0.0
    %1153 = vmatprep.subr.mxu0 0.0
    %1154 = vmatpush1.msra.mxu0 0.0
    %1155 = vmatprep.subr.mxu0 0.0
    %1156 = vmatpush1.msra.mxu0 0.0
    %1157 = vmatprep.subr.mxu0 0.0
    %1158 = vmatpush1.msra.mxu0 0.0
    %1159 = vmatprep.subr.mxu0 0.0
    %1160 = vmatpush1.msra.mxu0 0.0
    %1161 = vmatprep.subr.mxu0 0.0
    %1162 = vmatpush1.msra.mxu0 0.0
    %1163 = vmatprep.subr.mxu0 0.0
    %1164 = vmatpush1.msra.mxu0 0.0
    %1165 = vmatprep.subr.mxu0 0.0
    %1166 = vmatpush1.msra.mxu0 0.0
    %1167 = vmatprep.subr.mxu0 0.0
    %1168 = vmatpush1.msra.mxu0 0.0
    %1169 = vmatprep.subr.mxu0 0.0
    %1170 = vmatpush1.msra.mxu0 0.0
    %1171 = vmatprep.subr.mxu0 0.0
    %1172 = vmatpush1.msra.mxu0 0.0
    %1173 = vmatprep.subr.mxu0 0.0
    %1174 = vmatpush1.msra.mxu0 0.0
    %1175 = vmatprep.subr.mxu0 0.0
    %1176 = vmatpush1.msra.mxu0 0.0
    %1177 = vmatprep.subr.mxu0 0.0
    %1178 = vmatpush1.msra.mxu0 0.0
    %1179 = vmatprep.subr.mxu0 0.0
    %1180 = vmatpush1.msra.mxu0 0.0
    %1181 = vmatprep.subr.mxu0 0.0
    %1182 = vmatpush1.msra.mxu0 0.0
    %1183 = vmatprep.subr.mxu0 0.0
    %1184 = vmatpush1.msra.mxu0 0.0
    %1185 = vmatprep.subr.mxu0 0.0
    %1186 = vmatpush1.msra.mxu0 0.0
    %1187 = vmatprep.subr.mxu0 0.0
    %1188 = vmatpush1.msra.mxu0 0.0
    %1189 = vmatprep.subr.mxu0 0.0
    %1190 = vmatpush1.msra.mxu0 0.0
    %1191 = vmatprep.subr.mxu0 0.0
    %1192 = vmatpush1.msra.mxu0 0.0
    %1193 = vmatprep.subr.mxu0 0.0
    %1194 = vmatpush1.msra.mxu0 0.0
    %1195 = vmatprep.subr.mxu0 0.0
    %1196 = vmatpush1.msra.mxu0 0.0
    %1197 = vmatprep.subr.mxu0 0.0
    %1198 = vmatpush1.msra.mxu0 0.0
    %1199 = vmatprep.subr.mxu0 0.0
    %1200 = vmatpush1.msra.mxu0 0.0
    %1201 = vmatprep.subr.mxu0 0.0
    %1202 = vmatpush1.msra.mxu0 0.0
    %1203 = vmatprep.subr.mxu0 0.0
    %1204 = vmatpush1.msra.mxu0 0.0
    %1205 = vmatprep.subr.mxu0 0.0
    %1206 = vmatpush1.msra.mxu0 0.0
    %1207 = vmatprep.subr.mxu0 0.0
    %1208 = vmatpush1.msra.mxu0 0.0
    %1209 = vmatprep.mubr.f32.mxu0 0.0
    %1210 = vmatmul.mubr.f32.gmra.mrb[0].mxu0 %v1140
    %v1211 = vpop.f32.mrb[0].mxu0
    %v1212 = vadd.f32 0.0, %v1211
    %v1213 = vpop.f32.mrb[0].mxu0
    %1214 = vmatprep.mubr.f32.mxu0 0.0
    %1215 = vmatmul.mubr.f32.gmra.mrb[0].mxu0 %v1143
    %v1216 = vpop.f32.mrb[0].mxu0
    %v1217 = vadd.f32 0.0, %v1216
    %v1218 = vpop.f32.mrb[0].mxu0
    %1219 = vdwg.mxu0
    %v1220 = vadd.f32 %v1032, %v1212
    %v1221 = vadd.f32 %v1033, %v1217
    %v1222 = vsel %vm145, %v1220, 0.0
    %1223 = vadd.xlane.f32.xlu0 %v1222
    %v1224 = vpop.xlane.xlu0 %1223
    %v1225 = vsel %vm145, %v1221, 0.0
    %1226 = vadd.xlane.f32.xlu0 %v1225
    %v1227 = vpop.xlane.xlu0 %1226
    %v1228 = vmul.f32 %v1224, %v340
    %v1229 = vmul.f32 %v1227, %v340
    %v1230 = vsub.f32 %v1220, %v1228
    %v1231 = vsub.f32 %v1221, %v1229
    %v1232 = vmul.f32 %v1230, %v1230
    %v1233 = vmul.f32 %v1231, %v1231
    %v1234 = vsel %vm145, %v1232, 0.0
    %1235 = vadd.xlane.f32.xlu0 %v1234
    %v1236 = vpop.xlane.xlu0 %1235
    %v1237 = vsel %vm145, %v1233, 0.0
    %1238 = vadd.xlane.f32.xlu0 %v1237
    %v1239 = vpop.xlane.xlu0 %1238
    %v1240 = vmul.f32 %v1236, %v340
    %v1241 = vmul.f32 %v1239, %v340
    %v1242 = vadd.f32 %v1240, 1e-05
    %v1243 = vadd.f32 %v1241, 1e-05
    %v1244 = vrsqrt.pop %v1242
    %v1245 = vrsqrt.pop %v1243
    %v1246 = vmul.f32 %v1230, %v1244
    %v1247 = vmul.f32 %v1231, %v1245
    %v1248 = vlaneseq
    %v1249 = vshrl.u32 %v1248, 7
    %v1250 = vsub.s32 2, %v1249
    %v1251 = vrot.slane %v40, %v1250
    %v1252 = vmul.f32 %v1246, %v1251
    %v1253 = vmul.f32 %v1247, %v1251
    %1255 = vrot.lane.b32.xlu0 %v1251, 96
    %v1256 = vpop.permute.xlu0 %1255
    %v1258 = vadd.f32 %v1252, %v1256
    %v1259 = vadd.f32 %v1253, %v1256
    %v1260 = vld [vmem:[#allocation5 + $0x40] sm:$0xff]
    %v1261 = vld [vmem:[#allocation5 + $0x48] sm:$0xff]
    %v1262 = vld [vmem:[#allocation5 + $0x50] sm:$0xff]
    %v1263 = vld [vmem:[#allocation5 + $0x58] sm:$0xff]
    %v1264 = vld [vmem:[#allocation5 + $0xa0] sm:$0xff]
    %v1265 = vld [vmem:[#allocation5 + $0xa8] sm:$0xff]
    %v1266 = vld [vmem:[#allocation5 + $0xb0] sm:$0xff]
    %v1267 = vld [vmem:[#allocation5 + $0xb8] sm:$0xff]
    %v1268 = vlaneseq
    %v1269 = vshrl.u32 %v1268, 7
    %v1270 = vsub.s32 5, %v1269
    %v1271 = vrot.slane %v40, %v1270
    %v1273 = vsel %vm145, %v1258, 0
    %v1276 = vsel %vm145, %v1259, 0
    %1278 = vmatprep.subr.mxu0 0.0
    %1279 = vmatpush1.msra.mxu0 %v1260
    %1280 = vmatprep.subr.mxu0 0.0
    %1281 = vmatpush1.msra.mxu0 %v1261
    %1282 = vmatprep.subr.mxu0 0.0
    %1283 = vmatpush1.msra.mxu0 %v1262
    %1284 = vmatprep.subr.mxu0 0.0
    %1285 = vmatpush1.msra.mxu0 %v1263
    %1286 = vmatprep.subr.mxu0 0.0
    %1287 = vmatpush1.msra.mxu0 0.0
    %1288 = vmatprep.subr.mxu0 0.0
    %1289 = vmatpush1.msra.mxu0 0.0
    %1290 = vmatprep.subr.mxu0 0.0
    %1291 = vmatpush1.msra.mxu0 0.0
    %1292 = vmatprep.subr.mxu0 0.0
    %1293 = vmatpush1.msra.mxu0 0.0
    %1294 = vmatprep.subr.mxu0 0.0
    %1295 = vmatpush1.msra.mxu0 0.0
    %1296 = vmatprep.subr.mxu0 0.0
    %1297 = vmatpush1.msra.mxu0 0.0
    %1298 = vmatprep.subr.mxu0 0.0
    %1299 = vmatpush1.msra.mxu0 0.0
    %1300 = vmatprep.subr.mxu0 0.0
    %1301 = vmatpush1.msra.mxu0 0.0
    %1302 = vmatprep.subr.mxu0 0.0
    %1303 = vmatpush1.msra.mxu0 0.0
    %1304 = vmatprep.subr.mxu0 0.0
    %1305 = vmatpush1.msra.mxu0 0.0
    %1306 = vmatprep.subr.mxu0 0.0
    %1307 = vmatpush1.msra.mxu0 0.0
    %1308 = vmatprep.subr.mxu0 0.0
    %1309 = vmatpush1.msra.mxu0 0.0
    %1310 = vmatprep.subr.mxu0 0.0
    %1311 = vmatpush1.msra.mxu0 0.0
    %1312 = vmatprep.subr.mxu0 0.0
    %1313 = vmatpush1.msra.mxu0 0.0
    %1314 = vmatprep.subr.mxu0 0.0
    %1315 = vmatpush1.msra.mxu0 0.0
    %1316 = vmatprep.subr.mxu0 0.0
    %1317 = vmatpush1.msra.mxu0 0.0
    %1318 = vmatprep.subr.mxu0 0.0
    %1319 = vmatpush1.msra.mxu0 0.0
    %1320 = vmatprep.subr.mxu0 0.0
    %1321 = vmatpush1.msra.mxu0 0.0
    %1322 = vmatprep.subr.mxu0 0.0
    %1323 = vmatpush1.msra.mxu0 0.0
    %1324 = vmatprep.subr.mxu0 0.0
    %1325 = vmatpush1.msra.mxu0 0.0
    %1326 = vmatprep.subr.mxu0 0.0
    %1327 = vmatpush1.msra.mxu0 0.0
    %1328 = vmatprep.subr.mxu0 0.0
    %1329 = vmatpush1.msra.mxu0 0.0
    %1330 = vmatprep.subr.mxu0 0.0
    %1331 = vmatpush1.msra.mxu0 0.0
    %1332 = vmatprep.subr.mxu0 0.0
    %1333 = vmatpush1.msra.mxu0 0.0
    %1334 = vmatprep.subr.mxu0 0.0
    %1335 = vmatpush1.msra.mxu0 0.0
    %1336 = vmatprep.subr.mxu0 0.0
    %1337 = vmatpush1.msra.mxu0 0.0
    %1338 = vmatprep.subr.mxu0 0.0
    %1339 = vmatpush1.msra.mxu0 0.0
    %1340 = vmatprep.subr.mxu0 0.0
    %1341 = vmatpush1.msra.mxu0 0.0
    %1342 = vmatprep.mubr.f32.mxu0 0.0
    %1343 = vmatmul.mubr.f32.gmra.mrb[0].mxu0 %v1273
    %v1344 = vpop.f32.mrb[0].mxu0
    %v1345 = vadd.f32 %v1271, %v1344
    %v1346 = vpop.f32.mrb[0].mxu0
    %1347 = vmatprep.mubr.f32.mxu0 0.0
    %1348 = vmatmul.mubr.f32.gmra.mrb[0].mxu0 %v1276
    %v1349 = vpop.f32.mrb[0].mxu0
    %v1350 = vadd.f32 %v1271, %v1349
    %v1351 = vpop.f32.mrb[0].mxu0
    %1352 = vdwg.mxu0
    %v1353 = vmul.f32 %v1345, 0.5
    %v1354 = vmul.f32 %v1350, 0.5
    %v1355 = vmul.f32 %v1345, 0.70710677
    %v1356 = vmul.f32 %v1350, 0.70710677
    %v1357 = verf.f32.pop %v1355
    %v1358 = verf.f32.pop %v1356
    %v1359 = vadd.f32 %v1357, 1.0
    %v1360 = vadd.f32 %v1358, 1.0
    %v1361 = vmul.f32 %v1353, %v1359
    %v1362 = vmul.f32 %v1354, %v1360
    %1363 = vrot.lane.b32.xlu0 %v48, 64
    %v1364 = vpop.permute.xlu0 %1363
    %1366 = vmatprep.subr.mxu0 0.0
    %1367 = vmatpush1.xpose.msra.mxu0 %v1264
    %1368 = vmatprep.subr.mxu0 0.0
    %1369 = vmatpush1.xpose.msra.mxu0 %v1265
    %1370 = vmatprep.subr.mxu0 0.0
    %1371 = vmatpush1.xpose.msra.mxu0 %v1266
    %1372 = vmatprep.subr.mxu0 0.0
    %1373 = vmatpush1.xpose.msra.mxu0 %v1267
    %1374 = vmatprep.subr.mxu0 0.0
    %1375 = vmatpush1.xpose.msra.mxu0 0.0
    %1376 = vmatprep.subr.mxu0 0.0
    %1377 = vmatpush1.xpose.msra.mxu0 0.0
    %1378 = vmatprep.subr.mxu0 0.0
    %1379 = vmatpush1.xpose.msra.mxu0 0.0
    %1380 = vmatprep.subr.mxu0 0.0
    %1381 = vmatpush1.xpose.msra.mxu0 0.0
    %1382 = vmatprep.subr.mxu0 0.0
    %1383 = vmatpush1.xpose.msra.mxu0 0.0
    %1384 = vmatprep.subr.mxu0 0.0
    %1385 = vmatpush1.xpose.msra.mxu0 0.0
    %1386 = vmatprep.subr.mxu0 0.0
    %1387 = vmatpush1.xpose.msra.mxu0 0.0
    %1388 = vmatprep.subr.mxu0 0.0
    %1389 = vmatpush1.xpose.msra.mxu0 0.0
    %1390 = vmatprep.subr.mxu0 0.0
    %1391 = vmatpush1.xpose.msra.mxu0 0.0
    %1392 = vmatprep.subr.mxu0 0.0
    %1393 = vmatpush1.xpose.msra.mxu0 0.0
    %1394 = vmatprep.subr.mxu0 0.0
    %1395 = vmatpush1.xpose.msra.mxu0 0.0
    %1396 = vmatprep.subr.mxu0 0.0
    %1397 = vmatpush1.xpose.msra.mxu0 0.0
    %1398 = vmatprep.subr.mxu0 0.0
    %1399 = vmatpush1.xpose.msra.mxu0 0.0
    %1400 = vmatprep.subr.mxu0 0.0
    %1401 = vmatpush1.xpose.msra.mxu0 0.0
    %1402 = vmatprep.subr.mxu0 0.0
    %1403 = vmatpush1.xpose.msra.mxu0 0.0
    %1404 = vmatprep.subr.mxu0 0.0
    %1405 = vmatpush1.xpose.msra.mxu0 0.0
    %1406 = vmatprep.subr.mxu0 0.0
    %1407 = vmatpush1.xpose.msra.mxu0 0.0
    %1408 = vmatprep.subr.mxu0 0.0
    %1409 = vmatpush1.xpose.msra.mxu0 0.0
    %1410 = vmatprep.subr.mxu0 0.0
    %1411 = vmatpush1.xpose.msra.mxu0 0.0
    %1412 = vmatprep.subr.mxu0 0.0
    %1413 = vmatpush1.xpose.msra.mxu0 0.0
    %1414 = vmatprep.subr.mxu0 0.0
    %1415 = vmatpush1.xpose.msra.mxu0 0.0
    %1416 = vmatprep.subr.mxu0 0.0
    %1417 = vmatpush1.xpose.msra.mxu0 0.0
    %1418 = vmatprep.subr.mxu0 0.0
    %1419 = vmatpush1.xpose.msra.mxu0 0.0
    %1420 = vmatprep.subr.mxu0 0.0
    %1421 = vmatpush1.xpose.msra.mxu0 0.0
    %1422 = vmatprep.subr.mxu0 0.0
    %1423 = vmatpush1.xpose.msra.mxu0 0.0
    %1424 = vmatprep.subr.mxu0 0.0
    %1425 = vmatpush1.xpose.msra.mxu0 0.0
    %1426 = vmatprep.subr.mxu0 0.0
    %1427 = vmatpush1.xpose.msra.mxu0 0.0
    %1428 = vmatprep.subr.mxu0 0.0
    %1429 = vmatpush1.xpose.msra.mxu0 0.0
    %1430 = vmatprep.mubr.f32.mxu0 0.0
    %1431 = vmatmul.mubr.f32.gmra.mrb[0].mxu0 %v1361
    %v1432 = vpop.f32.mrb[0].mxu0
    %v1433 = vadd.f32 %v1364, %v1432
    %v1434 = vpop.f32.mrb[0].mxu0
    %1435 = vmatprep.mubr.f32.mxu0 0.0
    %1436 = vmatmul.mubr.f32.gmra.mrb[0].mxu0 %v1362
    %v1437 = vpop.f32.mrb[0].mxu0
    %v1438 = vadd.f32 %v1364, %v1437
    %v1439 = vpop.f32.mrb[0].mxu0
    %1440 = vdwg.mxu0
    %v1441 = vadd.f32 %v1258, %v1433
    %v1442 = vadd.f32 %v1259, %v1438
    %v1443 = vsel %vm145, %v1441, 0.0
    %1444 = vadd.xlane.f32.xlu0 %v1443
    %v1445 = vpop.xlane.xlu0 %1444
    %v1446 = vsel %vm145, %v1442, 0.0
    %1447 = vadd.xlane.f32.xlu0 %v1446
    %v1448 = vpop.xlane.xlu0 %1447
    %v1449 = vmul.f32 %v1445, %v340
    %v1450 = vmul.f32 %v1448, %v340
    %v1451 = vsub.f32 %v1441, %v1449
    %v1452 = vsub.f32 %v1442, %v1450
    %v1453 = vmul.f32 %v1451, %v1451
    %v1454 = vmul.f32 %v1452, %v1452
    %v1455 = vsel %vm145, %v1453, 0.0
    %1456 = vadd.xlane.f32.xlu0 %v1455
    %v1457 = vpop.xlane.xlu0 %1456
    %v1458 = vsel %vm145, %v1454, 0.0
    %1459 = vadd.xlane.f32.xlu0 %v1458
    %v1460 = vpop.xlane.xlu0 %1459
    %v1461 = vmul.f32 %v1457, %v340
    %v1462 = vmul.f32 %v1460, %v340
    %v1463 = vadd.f32 %v1461, 1e-05
    %v1464 = vadd.f32 %v1462, 1e-05
    %v1465 = vrsqrt.pop %v1463
    %v1466 = vrsqrt.pop %v1464
    %v1467 = vmul.f32 %v1451, %v1465
    %v1468 = vmul.f32 %v1452, %v1466
    %1469 = vrot.lane.b32.xlu0 %v1251, 64
    %v1470 = vpop.permute.xlu0 %1469
    %v1472 = vmul.f32 %v1467, %v1470
    %v1473 = vmul.f32 %v1468, %v1470
    %1474 = vrot.lane.b32.xlu0 %v1251, 32
    %v1475 = vpop.permute.xlu0 %1474
    %v1477 = vadd.f32 %v1472, %v1475
    %v1478 = vadd.f32 %v1473, %v1475
    %v1479 = vld [vmem:[#allocation5 + $0xd0] sm:$0xff]
    %v1480 = vld [vmem:[#allocation5 + $0xd8] sm:$0xff]
    %v1481 = vld [vmem:[#allocation5 + $0xe0] sm:$0xff]
    %v1482 = vld [vmem:[#allocation5 + $0xe8] sm:$0xff]
    %v1483 = vlaneseq
    %v1484 = vshrl.u32 %v1483, 7
    %v1485 = vsub.s32 7, %v1484
    %v1486 = vrot.slane %v40, %v1485
    %v1488 = vsel %vm145, %v1477, 0
    %v1491 = vsel %vm145, %v1478, 0
    %1493 = vmatprep.subr.mxu0 0.0
    %1494 = vmatpush1.msra.mxu0 %v1479
    %1495 = vmatprep.subr.mxu0 0.0
    %1496 = vmatpush1.msra.mxu0 %v1480
    %1497 = vmatprep.subr.mxu0 0.0
    %1498 = vmatpush1.msra.mxu0 %v1481
    %1499 = vmatprep.subr.mxu0 0.0
    %1500 = vmatpush1.msra.mxu0 %v1482
    %1501 = vmatprep.subr.mxu0 0.0
    %1502 = vmatpush1.msra.mxu0 0.0
    %1503 = vmatprep.subr.mxu0 0.0
    %1504 = vmatpush1.msra.mxu0 0.0
    %1505 = vmatprep.subr.mxu0 0.0
    %1506 = vmatpush1.msra.mxu0 0.0
    %1507 = vmatprep.subr.mxu0 0.0
    %1508 = vmatpush1.msra.mxu0 0.0
    %1509 = vmatprep.subr.mxu0 0.0
    %1510 = vmatpush1.msra.mxu0 0.0
    %1511 = vmatprep.subr.mxu0 0.0
    %1512 = vmatpush1.msra.mxu0 0.0
    %1513 = vmatprep.subr.mxu0 0.0
    %1514 = vmatpush1.msra.mxu0 0.0
    %1515 = vmatprep.subr.mxu0 0.0
    %1516 = vmatpush1.msra.mxu0 0.0
    %1517 = vmatprep.subr.mxu0 0.0
    %1518 = vmatpush1.msra.mxu0 0.0
    %1519 = vmatprep.subr.mxu0 0.0
    %1520 = vmatpush1.msra.mxu0 0.0
    %1521 = vmatprep.subr.mxu0 0.0
    %1522 = vmatpush1.msra.mxu0 0.0
    %1523 = vmatprep.subr.mxu0 0.0
    %1524 = vmatpush1.msra.mxu0 0.0
    %1525 = vmatprep.subr.mxu0 0.0
    %1526 = vmatpush1.msra.mxu0 0.0
    %1527 = vmatprep.subr.mxu0 0.0
    %1528 = vmatpush1.msra.mxu0 0.0
    %1529 = vmatprep.subr.mxu0 0.0
    %1530 = vmatpush1.msra.mxu0 0.0
    %1531 = vmatprep.subr.mxu0 0.0
    %1532 = vmatpush1.msra.mxu0 0.0
    %1533 = vmatprep.subr.mxu0 0.0
    %1534 = vmatpush1.msra.mxu0 0.0
    %1535 = vmatprep.subr.mxu0 0.0
    %1536 = vmatpush1.msra.mxu0 0.0
    %1537 = vmatprep.subr.mxu0 0.0
    %1538 = vmatpush1.msra.mxu0 0.0
    %1539 = vmatprep.subr.mxu0 0.0
    %1540 = vmatpush1.msra.mxu0 0.0
    %1541 = vmatprep.subr.mxu0 0.0
    %1542 = vmatpush1.msra.mxu0 0.0
    %1543 = vmatprep.subr.mxu0 0.0
    %1544 = vmatpush1.msra.mxu0 0.0
    %1545 = vmatprep.subr.mxu0 0.0
    %1546 = vmatpush1.msra.mxu0 0.0
    %1547 = vmatprep.subr.mxu0 0.0
    %1548 = vmatpush1.msra.mxu0 0.0
    %1549 = vmatprep.subr.mxu0 0.0
    %1550 = vmatpush1.msra.mxu0 0.0
    %1551 = vmatprep.subr.mxu0 0.0
    %1552 = vmatpush1.msra.mxu0 0.0
    %1553 = vmatprep.subr.mxu0 0.0
    %1554 = vmatpush1.msra.mxu0 0.0
    %1555 = vmatprep.subr.mxu0 0.0
    %1556 = vmatpush1.msra.mxu0 0.0
    %1557 = vmatprep.mubr.f32.mxu0 0.0
    %1558 = vmatmul.mubr.f32.gmra.mrb[0].mxu0 %v1488
    %v1559 = vpop.f32.mrb[0].mxu0
    %v1560 = vadd.f32 %v1486, %v1559
    %v1561 = vpop.f32.mrb[0].mxu0
    %1562 = vmatprep.mubr.f32.mxu0 0.0
    %1563 = vmatmul.mubr.f32.gmra.mrb[0].mxu0 %v1491
    %v1564 = vpop.f32.mrb[0].mxu0
    %v1565 = vadd.f32 %v1486, %v1564
    %v1566 = vpop.f32.mrb[0].mxu0
    %1567 = vdwg.mxu0
    %1568 = vst [vmem:[#allocation7] sm:$0xff] %v1560
    %1569 = vst [vmem:[#allocation7 + $0x8] sm:$0xff] %v1565
    // Predicated region
    $region18: #{tpu_custom_call.1} parent=1 // pred_check
      _
    $region19: #{tpu_custom_call.1} parent=1 // pred_check_branch
      %1571 = sbr.rel (0) target = $region21
    $region20: #{tpu_custom_call.1} parent=1 // pred_region
      %s1573 = ssub.s32 256, 256
      %1574 = vsyncadd [#allocation4], %s1573
      %s1575 = sshll.u32 [#allocation7], 4
      %s1576 = int_to_ptr.vmem [resolvable:$true] %s1575
      %1581 = dma.vmem_to_hbm [thread:$0]  %s1576, 256, %s2, [#allocation4], 128, 128, 8
    $region21: #{tpu_custom_call.1} parent=1 // pred_fallthru
      _
    // Predicated region
    $region22: #{tpu_custom_call.1} parent=1 // pred_check
      _
    $region23: #{tpu_custom_call.1} parent=1 // pred_check_branch
      %1583 = sbr.rel (0) target = $region25
    $region24: #{tpu_custom_call.1} parent=1 // pred_region
      %1584 = dma.done [#allocation4], 256
    $region25: #{tpu_custom_call.1} parent=1 // pred_fallthru
      _
    %1585 = vsyncpa [#allocation3], 1
    %1586 = vsyncpa [#allocation6], 1
    %1587 = vsyncpa [#allocation4], 1

</llo_original>
